<compile_context>
chip_gen: v6e
topology: v6e:2x2x1
jax: 0.10.0
libtpu: 0.0.40
codegen_flags: <defaults>
</compile_context>

<pallas_src>
import functools
import math

import jax
import jax.numpy as jnp
from jax import lax
from jax.experimental import pallas as pl
from jax.experimental.pallas import tpu as pltpu


def ffn_kernel(x_ref, w1_ref, b1_ref, w2_ref, b2_ref, g_ref, beta_ref,
               o_ref, acc_ref, *, eps):
    """Grid = (row_tiles, k_tiles). One (row, k) step of the fused FFN.

    x_ref   : [TB, d_model]   native dtype (k-invariant block -> no re-DMA)
    w1_ref  : [d_model, TK]   bf16, k-th column slab of W1
    b1_ref  : [1, TK]         f32, k-th slab of b1
    w2_ref  : [TK, d_model]   bf16, k-th row slab of W2
    b2_ref  : [1, d_model]    f32
    g_ref   : [1, d_model]    f32 (LayerNorm gamma)
    beta_ref: [1, d_model]    f32 (LayerNorm beta)
    o_ref   : [TB, d_model]   output tile (written only on the last k step)
    acc_ref : [TB, d_model]   f32 VMEM accumulator for the w_2 partial sums
    """
    k = pl.program_id(1)

    @pl.when(k == 0)
    def _():
        acc_ref[...] = jnp.zeros_like(acc_ref)

    x = x_ref[...]

    # --- w_1 slab + ReLU (bf16 operands, f32 accumulation on the MXU) --------
    h = jnp.dot(x.astype(w1_ref.dtype), w1_ref[...],
                preferred_element_type=jnp.float32)
    h = jnp.maximum(h + b1_ref[...], 0.0)                       # [TB, TK] f32

    # --- partial w_2: cast the live chunk to bf16 right away ------------------
    acc_ref[...] += jnp.dot(h.astype(w2_ref.dtype), w2_ref[...],
                            preferred_element_type=jnp.float32)

    # --- epilogue: bias + residual + LayerNorm, once per row tile -------------
    @pl.when(k == pl.num_programs(1) - 1)
    def _():
        y = acc_ref[...] + b2_ref[...]
        # TODO(synk): train-mode dropout (pltpu.prng_*); eval path is identity.
        z = x.astype(jnp.float32) + y                           # residual in f32
        inv_d = jnp.float32(1.0 / z.shape[-1])
        mean = jnp.sum(z, axis=-1, keepdims=True) * inv_d
        var = jnp.sum(z * z, axis=-1, keepdims=True) * inv_d - mean * mean
        inv = lax.rsqrt(var + eps)                              # EUP rsqrt
        out = (z - mean) * inv * g_ref[...] + beta_ref[...]
        o_ref[...] = out.astype(o_ref.dtype)


def positionwise_ffn(x, w1, b1, w2, b2, gamma, beta, *, eps=1e-6,
                     tb=256, tk=512, weight_dtype=jnp.bfloat16):
    """x: [..., d_model]; w1: [d_model, d_inner]; w2: [d_inner, d_model]."""
    orig_shape = x.shape
    d_model = orig_shape[-1]
    d_inner = w1.shape[1]

    x2 = x.reshape(-1, d_model)
    n = x2.shape[0]

    # Row tile: multiple of 8 (or the full row count when it is smaller).
    if n <= tb:
        tb = n
    else:
        tb = max(8, (tb // 8) * 8)
    n_row_tiles = pl.cdiv(n, tb)          # ragged last block handled by Pallas

    # K tile: lane-aligned; pad d_inner with zeros if needed (zero W1 columns /
    # b1 entries / W2 rows contribute exactly zero through the ReLU).
    if d_inner <= tk:
        tk = d_inner
    else:
        tk = max(128, (tk // 128) * 128)
    d_inner_p = int(math.ceil(d_inner / tk) * tk)
    pad_k = d_inner_p - d_inner
    n_k_tiles = d_inner_p // tk

    w1c = w1.astype(weight_dtype)
    w2c = w2.astype(weight_dtype)
    b1f = b1.astype(jnp.float32)
    if pad_k:
        w1c = jnp.pad(w1c, ((0, 0), (0, pad_k)))
        b1f = jnp.pad(b1f, ((0, pad_k),))
        w2c = jnp.pad(w2c, ((0, pad_k), (0, 0)))

    b1_2d = b1f.reshape(1, d_inner_p)
    b2_2d = b2.astype(jnp.float32).reshape(1, d_model)
    g_2d = gamma.astype(jnp.float32).reshape(1, d_model)
    be_2d = beta.astype(jnp.float32).reshape(1, d_model)

    isz = lambda dt: jnp.dtype(dt).itemsize
    # VMEM budget: double-buffered x/out/weight-slabs/params + f32 accumulator
    # + the live [TB, TK] ReLU chunk (f32 + bf16 copy), with headroom.
    est = (2 * (tb * d_model * isz(x.dtype)                 # x tile
                + tb * d_model * isz(x.dtype)               # out tile
                + d_model * tk * isz(weight_dtype)          # w1 slab
                + tk * d_model * isz(weight_dtype)          # w2 slab
                + tk * 4 + 3 * d_model * 4)                 # b1 slab, b2, gamma, beta
           + tb * d_model * 4                               # accumulator scratch
           + tb * tk * (4 + isz(weight_dtype)))             # live ReLU chunk
    vmem_limit = int(min(max(2 * est + (8 << 20), 16 << 20), 96 << 20))

    flops = 4 * n * d_model * d_inner_p
    bytes_accessed = int(x2.size * isz(x.dtype) * 2
                         + int(n_row_tiles) * (w1c.size + w2c.size) * isz(weight_dtype)
                         + (d_inner_p + 3 * d_model) * 4)

    out = pl.pallas_call(
        functools.partial(ffn_kernel, eps=eps),
        out_shape=jax.ShapeDtypeStruct((n, d_model), x.dtype),
        grid=(n_row_tiles, n_k_tiles),
        in_specs=[
            pl.BlockSpec((tb, d_model), lambda i, k: (i, 0)),     # x (k-invariant)
            pl.BlockSpec((d_model, tk), lambda i, k: (0, k)),     # w1 slab
            pl.BlockSpec((1, tk), lambda i, k: (0, k)),           # b1 slab
            pl.BlockSpec((tk, d_model), lambda i, k: (k, 0)),     # w2 slab
            pl.BlockSpec((1, d_model), lambda i, k: (0, 0)),      # b2
            pl.BlockSpec((1, d_model), lambda i, k: (0, 0)),      # gamma
            pl.BlockSpec((1, d_model), lambda i, k: (0, 0)),      # beta
        ],
        out_specs=pl.BlockSpec((tb, d_model), lambda i, k: (i, 0)),
        scratch_shapes=[pltpu.VMEM((tb, d_model), jnp.float32)],
        compiler_params=pltpu.CompilerParams(
            dimension_semantics=("parallel", "arbitrary"),
            vmem_limit_bytes=vmem_limit),
        cost_estimate=pl.CostEstimate(
            flops=flops, transcendentals=n, bytes_accessed=bytes_accessed),
    )(x2, w1c, b1_2d, w2c, b2_2d, g_2d, be_2d)

    return out.reshape(orig_shape)


def positionwise_ffn_reference(x, w1, b1, w2, b2, gamma, beta, eps=1e-6):
    """Pure-JAX f32 reference mirroring the PyTorch forward (eval mode)."""
    h = jnp.maximum(x @ w1 + b1, 0.0)
    y = h @ w2 + b2
    z = x + y
    mean = jnp.mean(z, axis=-1, keepdims=True)
    var = jnp.mean((z - mean) ** 2, axis=-1, keepdims=True)
    return (z - mean) / jnp.sqrt(var + eps) * gamma + beta


if __name__ == "__main__":
    key = jax.random.PRNGKey(0)
    k_x, k_w1, k_b1, k_w2, k_b2 = jax.random.split(key, 5)

    # rows = 2*256 = 512 -> 2 row tiles of 256 (even count balances v7x's 2 TCs);
    # d_inner = 1024 -> 2 K tiles of 512 (exercises the reduction grid axis).
    B, S, D_MODEL, D_INNER = 2, 256, 128, 1024

    x = jax.random.normal(k_x, (B, S, D_MODEL), dtype=jnp.float32)
    # Weights stored as [d_in, d_out] (nn.Linear.weight transposed).
    w1 = 0.02 * jax.random.normal(k_w1, (D_MODEL, D_INNER), dtype=jnp.float32)
    b1 = 0.01 * jax.random.normal(k_b1, (D_INNER,), dtype=jnp.float32)
    w2 = 0.02 * jax.random.normal(k_w2, (D_INNER, D_MODEL), dtype=jnp.float32)
    b2 = 0.01 * jax.random.normal(k_b2, (D_MODEL,), dtype=jnp.float32)
    gamma = jnp.ones((D_MODEL,), dtype=jnp.float32)    # LayerNorm init
    beta = jnp.zeros((D_MODEL,), dtype=jnp.float32)

    out = positionwise_ffn(x, w1, b1, w2, b2, gamma, beta, eps=1e-6)
    out = jax.block_until_ready(out)

    ref = positionwise_ffn_reference(x, w1, b1, w2, b2, gamma, beta, eps=1e-6)
    assert out.shape == (B, S, D_MODEL)
    err = float(jnp.max(jnp.abs(out - ref)))
    # Tolerance reflects bf16 MXU operands (f32 accumulation, f32 residual/LN).
    assert err < 2e-2, f"mismatch vs reference: max abs err = {err}"

    print("KERNEL_OK")
</pallas_src>

<mosaic_0001>
module attributes {stable_mosaic.version = 11 : i64} {
  func.func @ffn_kernel(%arg0: i32, %arg1: i32, %arg2: memref<256x128xf32, #tpu.memory_space<vmem>>, %arg3: memref<128x512xbf16, #tpu.memory_space<vmem>>, %arg4: memref<1x512xf32, #tpu.memory_space<vmem>>, %arg5: memref<512x128xbf16, #tpu.memory_space<vmem>>, %arg6: memref<1x128xf32, #tpu.memory_space<vmem>>, %arg7: memref<1x128xf32, #tpu.memory_space<vmem>>, %arg8: memref<1x128xf32, #tpu.memory_space<vmem>>, %arg9: memref<256x128xf32, #tpu.memory_space<vmem>>, %arg10: memref<256x128xf32, #tpu.memory_space<vmem>>) attributes {dimension_semantics = [#tpu.dimension_semantics<parallel>, #tpu.dimension_semantics<arbitrary>], iteration_bounds = array<i64: 2, 2>, scalar_prefetch = 0 : i64, scratch_operands = 1 : i64, tpu.core_type = #tpu.core_type<tc>, window_params = [{transform_indices = @transform_0, window_bounds = array<i64: 256, 128>}, {transform_indices = @transform_1, window_bounds = array<i64: 128, 512>}, {transform_indices = @transform_2, window_bounds = array<i64: 1, 512>}, {transform_indices = @transform_3, window_bounds = array<i64: 512, 128>}, {pipeline_mode = #tpu.pipeline_mode<synchronous>, transform_indices = @transform_4, window_bounds = array<i64: 1, 128>}, {pipeline_mode = #tpu.pipeline_mode<synchronous>, transform_indices = @transform_5, window_bounds = array<i64: 1, 128>}, {pipeline_mode = #tpu.pipeline_mode<synchronous>, transform_indices = @transform_6, window_bounds = array<i64: 1, 128>}, {transform_indices = @transform_7, window_bounds = array<i64: 256, 128>}]} {
    %c0_i32 = arith.constant 0 : i32
    %0 = arith.cmpi eq, %arg1, %c0_i32 : i32
    %1 = arith.extui %0 : i1 to i32
    %c0_i32_0 = arith.constant 0 : i32
    %2 = arith.cmpi ne, %1, %c0_i32_0 : i32
    scf.if %2 {
      %cst_15 = arith.constant 0.000000e+00 : f32
      %21 = vector.broadcast %cst_15 : f32 to vector<256x128xf32>
      %c0_16 = arith.constant 0 : index
      %c0_17 = arith.constant 0 : index
      %22 = vector.load %arg10[%c0_16, %c0_17] : memref<256x128xf32, #tpu.memory_space<vmem>>, vector<256x128xf32>
      tpu.vector_store %arg10[%c0_16, %c0_17], %21 {strides = array<i32>} : memref<256x128xf32, #tpu.memory_space<vmem>>, vector<256x128xf32>,
    } else {
    }
    %c0 = arith.constant 0 : index
    %c0_1 = arith.constant 0 : index
    %3 = vector.load %arg2[%c0, %c0_1] : memref<256x128xf32, #tpu.memory_space<vmem>>, vector<256x128xf32>
    %4 = arith.truncf %3 : vector<256x128xf32> to vector<256x128xbf16>
    %c0_2 = arith.constant 0 : index
    %c0_3 = arith.constant 0 : index
    %5 = vector.load %arg3[%c0_2, %c0_3] : memref<128x512xbf16, #tpu.memory_space<vmem>>, vector<128x512xbf16>
    %cst = arith.constant dense<0.000000e+00> : vector<256x512xf32>
    %6 = tpu.matmul %4, %5, %cst {dimension_numbers = #tpu.dot_dimension_numbers<[1], [0], [0], [1], [0, 0, 1, 1], [], []>} : vector<256x128xbf16>, vector<128x512xbf16>, vector<256x512xf32> -> vector<256x512xf32>
    %c0_4 = arith.constant 0 : index
    %c0_5 = arith.constant 0 : index
    %7 = vector.load %arg4[%c0_4, %c0_5] : memref<1x512xf32, #tpu.memory_space<vmem>>, vector<1x512xf32>
    %8 = vector.broadcast %7 : vector<1x512xf32> to vector<256x512xf32>
    %9 = arith.addf %6, %8 : vector<256x512xf32>
    %cst_6 = arith.constant 0.000000e+00 : f32
    %10 = vector.broadcast %cst_6 : f32 to vector<256x512xf32>
    %11 = arith.maximumf %9, %10 : vector<256x512xf32>
    %c0_7 = arith.constant 0 : index
    %c0_8 = arith.constant 0 : index
    %12 = vector.load %arg10[%c0_7, %c0_8] : memref<256x128xf32, #tpu.memory_space<vmem>>, vector<256x128xf32>
    %13 = arith.truncf %11 : vector<256x512xf32> to vector<256x512xbf16>
    %c0_9 = arith.constant 0 : index
    %c0_10 = arith.constant 0 : index
    %14 = vector.load %arg5[%c0_9, %c0_10] : memref<512x128xbf16, #tpu.memory_space<vmem>>, vector<512x128xbf16>
    %cst_11 = arith.constant dense<0.000000e+00> : vector<256x128xf32>
    %15 = tpu.matmul %13, %14, %cst_11 {dimension_numbers = #tpu.dot_dimension_numbers<[1], [0], [0], [1], [0, 0, 1, 1], [], []>} : vector<256x512xbf16>, vector<512x128xbf16>, vector<256x128xf32> -> vector<256x128xf32>
    %16 = arith.addf %12, %15 : vector<256x128xf32>
    %c0_12 = arith.constant 0 : index
    %c0_13 = arith.constant 0 : index
    %17 = vector.load %arg10[%c0_12, %c0_13] : memref<256x128xf32, #tpu.memory_space<vmem>>, vector<256x128xf32>
    tpu.vector_store %arg10[%c0_12, %c0_13], %16 {strides = array<i32>} : memref<256x128xf32, #tpu.memory_space<vmem>>, vector<256x128xf32>,
    %c1_i32 = arith.constant 1 : i32
    %18 = arith.cmpi eq, %arg1, %c1_i32 : i32
    %19 = arith.extui %18 : i1 to i32
    %c0_i32_14 = arith.constant 0 : i32
    %20 = arith.cmpi ne, %19, %c0_i32_14 : i32
    scf.if %20 {
      %c0_15 = arith.constant 0 : index
      %c0_16 = arith.constant 0 : index
      %21 = vector.load %arg10[%c0_15, %c0_16] : memref<256x128xf32, #tpu.memory_space<vmem>>, vector<256x128xf32>
      %c0_17 = arith.constant 0 : index
      %c0_18 = arith.constant 0 : index
      %22 = vector.load %arg6[%c0_17, %c0_18] : memref<1x128xf32, #tpu.memory_space<vmem>>, vector<1x128xf32>
      %23 = vector.broadcast %22 : vector<1x128xf32> to vector<256x128xf32>
      %24 = arith.addf %21, %23 : vector<256x128xf32>
      %25 = arith.addf %3, %24 : vector<256x128xf32>
      %cst_19 = arith.constant dense<0.000000e+00> : vector<256xf32>
      %26 = vector.multi_reduction <add>, %25, %cst_19 [1] : vector<256x128xf32> to vector<256xf32>
      %27 = vector.shape_cast %26 : vector<256xf32> to vector<256x1xf32>
      %cst_20 = arith.constant 7.812500e-03 : f32
      %28 = vector.broadcast %cst_20 : f32 to vector<256x1xf32>
      %29 = arith.mulf %27, %28 : vector<256x1xf32>
      %30 = arith.mulf %25, %25 : vector<256x128xf32>
      %cst_21 = arith.constant dense<0.000000e+00> : vector<256xf32>
      %31 = vector.multi_reduction <add>, %30, %cst_21 [1] : vector<256x128xf32> to vector<256xf32>
      %32 = vector.shape_cast %31 : vector<256xf32> to vector<256x1xf32>
      %cst_22 = arith.constant 7.812500e-03 : f32
      %33 = vector.broadcast %cst_22 : f32 to vector<256x1xf32>
      %34 = arith.mulf %32, %33 : vector<256x1xf32>
      %35 = arith.mulf %29, %29 : vector<256x1xf32>
      %36 = arith.subf %34, %35 : vector<256x1xf32>
      %cst_23 = arith.constant 9.99999997E-7 : f32
      %37 = vector.broadcast %cst_23 : f32 to vector<256x1xf32>
      %38 = arith.addf %36, %37 : vector<256x1xf32>
      %39 = math.rsqrt %38 : vector<256x1xf32>
      %40 = vector.broadcast %29 : vector<256x1xf32> to vector<256x128xf32>
      %41 = arith.subf %25, %40 : vector<256x128xf32>
      %42 = vector.broadcast %39 : vector<256x1xf32> to vector<256x128xf32>
      %43 = arith.mulf %41, %42 : vector<256x128xf32>
      %c0_24 = arith.constant 0 : index
      %c0_25 = arith.constant 0 : index
      %44 = vector.load %arg7[%c0_24, %c0_25] : memref<1x128xf32, #tpu.memory_space<vmem>>, vector<1x128xf32>
      %45 = vector.broadcast %44 : vector<1x128xf32> to vector<256x128xf32>
      %46 = arith.mulf %43, %45 : vector<256x128xf32>
      %c0_26 = arith.constant 0 : index
      %c0_27 = arith.constant 0 : index
      %47 = vector.load %arg8[%c0_26, %c0_27] : memref<1x128xf32, #tpu.memory_space<vmem>>, vector<1x128xf32>
      %48 = vector.broadcast %47 : vector<1x128xf32> to vector<256x128xf32>
      %49 = arith.addf %46, %48 : vector<256x128xf32>
      %c0_28 = arith.constant 0 : index
      %c0_29 = arith.constant 0 : index
      %50 = vector.load %arg9[%c0_28, %c0_29] : memref<256x128xf32, #tpu.memory_space<vmem>>, vector<256x128xf32>
      tpu.vector_store %arg9[%c0_28, %c0_29], %49 {strides = array<i32>} : memref<256x128xf32, #tpu.memory_space<vmem>>, vector<256x128xf32>,
    } else {
    }
    return
  }
  func.func @transform_0(%arg0: i32, %arg1: i32) -> (i32, i32) {
    %c0_i32 = arith.constant 0 : i32
    %c0_i32_0 = arith.constant 0 : i32
    return %arg0, %c0_i32 : i32, i32
  }
  func.func @transform_1(%arg0: i32, %arg1: i32) -> (i32, i32) {
    %c0_i32 = arith.constant 0 : i32
    %c0_i32_0 = arith.constant 0 : i32
    return %c0_i32, %arg1 : i32, i32
  }
  func.func @transform_2(%arg0: i32, %arg1: i32) -> (i32, i32) {
    %c0_i32 = arith.constant 0 : i32
    %c0_i32_0 = arith.constant 0 : i32
    return %c0_i32, %arg1 : i32, i32
  }
  func.func @transform_3(%arg0: i32, %arg1: i32) -> (i32, i32) {
    %c0_i32 = arith.constant 0 : i32
    %c0_i32_0 = arith.constant 0 : i32
    return %arg1, %c0_i32 : i32, i32
  }
  func.func @transform_4(%arg0: i32, %arg1: i32) -> (i32, i32) {
    %c0_i32 = arith.constant 0 : i32
    %c0_i32_0 = arith.constant 0 : i32
    %c0_i32_1 = arith.constant 0 : i32
    return %c0_i32, %c0_i32_0 : i32, i32
  }
  func.func @transform_5(%arg0: i32, %arg1: i32) -> (i32, i32) {
    %c0_i32 = arith.constant 0 : i32
    %c0_i32_0 = arith.constant 0 : i32
    %c0_i32_1 = arith.constant 0 : i32
    return %c0_i32, %c0_i32_0 : i32, i32
  }
  func.func @transform_6(%arg0: i32, %arg1: i32) -> (i32, i32) {
    %c0_i32 = arith.constant 0 : i32
    %c0_i32_0 = arith.constant 0 : i32
    %c0_i32_1 = arith.constant 0 : i32
    return %c0_i32, %c0_i32_0 : i32, i32
  }
  func.func @transform_7(%arg0: i32, %arg1: i32) -> (i32, i32) {
    %c0_i32 = arith.constant 0 : i32
    %c0_i32_0 = arith.constant 0 : i32
    return %arg0, %c0_i32 : i32, i32
  }
}

</mosaic_0001>

<llo_original>
// kernel: tpu_custom_call.1
$region0: #{tpu_custom_call.1}
  #allocation0 [shape = 'u32[]', space=smem, size = 0x4, offset = 0x4, fixed_abs, tag = 'smem constant byte address 0x4 - core index']
  #allocation1 [shape = 'u32[144,128]{1,0:T(1,128)}', space=vmem, size = 0x12000, scoped, tag = 'internal scratch']
  #allocation2 [shape = 'f32[256,128]{1,0:T(8,128)}', space=vmem, size = 0x20000, scoped, tag = 'scratch operand']
  %s0 = inlined_call_operand.hbm [shape: f32[512,128], index: 0, kind: input, shape index: {}]
  %s1 = inlined_call_operand.hbm [shape: bf16[128,1024], index: 1, kind: input, shape index: {}]
  %s2 = inlined_call_operand.hbm [shape: f32[1,1024], index: 2, kind: input, shape index: {}]
  %s3 = inlined_call_operand.hbm [shape: bf16[1024,128], index: 3, kind: input, shape index: {}]
  %s4 = inlined_call_operand.vmem [shape: f32[1,128], index: 4, kind: input, shape index: {}]
  %s5 = inlined_call_operand.vmem [shape: f32[1,128], index: 5, kind: input, shape index: {}]
  %s6 = inlined_call_operand.vmem [shape: f32[1,128], index: 6, kind: input, shape index: {}]
  %s7 = inlined_call_operand.hbm [shape: f32[512,128], index: 7, kind: output, shape index: {}]
  %s8 = sld [smem:[#allocation0]]
  $region85: #{tpu_custom_call.1} parent=0
    _
  %s10 = ssub.s32 1, %s8
  %s11 = scalar_select 0, %s10, %s8
  $region1: #{tpu_custom_call.1} parent=0
    #allocation3 [shape = 'u8[262144]{0}', space=vmem, size = 0x40000, scoped, tag = 'input window, operand 0']
    #allocation4 [shape = 's32[2]{0}', space=sflag, size = 0x8, scoped, tag = 'scoped memory for tpu_custom_call.1']
    #allocation5 [shape = 's32[2]{0}', space=sflag, size = 0x8, scoped, tag = 'scoped memory for tpu_custom_call.1']
    #allocation6 [shape = 'u8[262144]{0}', space=vmem, size = 0x40000, scoped, tag = 'input window, operand 1']
    #allocation7 [shape = 's32[2]{0}', space=sflag, size = 0x8, scoped, tag = 'scoped memory for tpu_custom_call.1']
    #allocation8 [shape = 'u8[4096]{0}', space=vmem, size = 0x1000, scoped, tag = 'input window, operand 2']
    #allocation9 [shape = 'u8[262144]{0}', space=vmem, size = 0x40000, scoped, tag = 'input window, operand 3']
    #allocation10 [shape = 's32[2]{0}', space=sflag, size = 0x8, scoped, tag = 'scoped memory for tpu_custom_call.1']
    #allocation11 [shape = 'u8[262144]{0}', space=vmem, size = 0x40000, scoped, tag = 'output window, operand 0']
    %12 = vsyncpa [#allocation4], 0
    %s13 = scalar_lea.sflag [#allocation4], 1
    %14 = vsyncpa %s13, 0
    %15 = vsyncpa [#allocation7], 0
    %s16 = scalar_lea.sflag [#allocation7], 1
    %17 = vsyncpa %s16, 0
    %18 = vsyncpa [#allocation10], 0
    %s19 = scalar_lea.sflag [#allocation10], 1
    %20 = vsyncpa %s19, 0
    %21 = vsyncpa [#allocation5], 0
    %s22 = scalar_lea.sflag [#allocation5], 1
    %23 = vsyncpa %s22, 0
    loop: start=0, step=1, limit=6
    $region2: #{tpu_custom_call.1} parent=1 // loop_pre_header
      _
    $region3: #{tpu_custom_call.1} parent=1 // loop_header
      %s25 = sphi 0, %s29
      %p26 = scmp.ge.s32.totalorder %s25, 6
      %s32 = sphi 0, %s44
      %s33 = sphi 0, %s40
      %s34 = sphi 0, %s32
      %s35 = sphi 0, %s33
      %s36 = sphi 0, %s34
      %s37 = sphi 0, %s35
      %s47 = sphi 0, %s49
      %s50 = sphi 0, %s47
      %s51 = sphi 0, %s50
      %s67 = sphi 0, %s51
      %s73 = sphi 0, %s75
      %s76 = sphi 0, %s73
      %s77 = sphi 0, %s76
      %s93 = sphi 0, %s77
      %s99 = sphi 0, %s101
      %s102 = sphi 0, %s99
      %s103 = sphi 0, %s102
      %s119 = sphi 0, %s103
      %s125 = sphi 0, %s127
      %s128 = sphi 0, %s125
      %s129 = sphi 0, %s128
      %s145 = sphi 0, %s129
      %s149 = sphi 0, %s149
      %s151 = sphi 0, %s149
      %s152 = sphi 0, %s151
      %s166 = sphi 0, %s152
      %s170 = sphi 0, %s170
      %s172 = sphi 0, %s170
      %s173 = sphi 0, %s172
      %s187 = sphi 0, %s173
      %s191 = sphi 0, %s191
      %s193 = sphi 0, %s191
      %s194 = sphi 0, %s193
      %s208 = sphi 0, %s194
      %s214 = sphi 0, %s216
      %s217 = sphi 0, %s214
      %s218 = sphi 0, %s217
      %s234 = sphi 0, %s218
    $region4: #{tpu_custom_call.1} parent=1 // loop_header_branch
      %28 = sbr.rel (%p26) target = $region8
    $region5: #{tpu_custom_call.1} parent=1 // loop_body
      %s30 = ssub.s32 %s25, 1
      %s31 = ssub.s32 %s25, 2
      %s38 = sadd.s32 1, %s33
      %p39 = scmp.ge.s32.totalorder %s38, 2
      %s40 = scalar_select %p39, 0, %s38
      %s41 = sadd.s32 1, %s32
      %s42 = scalar_select %p39, %s41, %s32
      %p43 = scmp.ge.s32.totalorder %s42, 2
      %s44 = scalar_select %p43, 0, %s42
      %s45 = ssub.s32 %s32, %s44
      %p46 = scmp.eq.s32.totalorder %s45, 0
      %s48 = sadd.s32 %s47, 1
      %s49 = scalar_select %p46, %s47, %s48
      %p52 = pneg %p46
      %p53 = scmp.eq.s32.totalorder %s25, 3
      %p54 = por %p52, %p53
      %p55 = scmp.ne.s32.totalorder %s47, %s50
      %p56 = scmp.eq.s32.totalorder %s25, 0
      %p57 = por %p55, %p56
      %p58 = scmp.ne.s32.totalorder %s47, %s50
      %p59 = scmp.eq.s32.totalorder %s30, 3
      %p60 = por %p58, %p59
      %p61 = scmp.ne.s32.totalorder %s50, %s51
      %p62 = scmp.eq.s32.totalorder %s30, 0
      %p63 = por %p61, %p62
      %p64 = scmp.ne.s32.totalorder %s50, %s51
      %p65 = scmp.eq.s32.totalorder %s31, 3
      %p66 = por %p64, %p65
      %p68 = scmp.ne.s32.totalorder %s51, %s67
      %p69 = scmp.eq.s32.totalorder %s31, 0
      %p70 = por %p68, %p69
      %s71 = ssub.s32 %s33, %s40
      %p72 = scmp.eq.s32.totalorder %s71, 0
      %s74 = sadd.s32 %s73, 1
      %s75 = scalar_select %p72, %s73, %s74
      %p78 = pneg %p72
      %p79 = scmp.eq.s32.totalorder %s25, 3
      %p80 = por %p78, %p79
      %p81 = scmp.ne.s32.totalorder %s73, %s76
      %p82 = scmp.eq.s32.totalorder %s25, 0
      %p83 = por %p81, %p82
      %p84 = scmp.ne.s32.totalorder %s73, %s76
      %p85 = scmp.eq.s32.totalorder %s30, 3
      %p86 = por %p84, %p85
      %p87 = scmp.ne.s32.totalorder %s76, %s77
      %p88 = scmp.eq.s32.totalorder %s30, 0
      %p89 = por %p87, %p88
      %p90 = scmp.ne.s32.totalorder %s76, %s77
      %p91 = scmp.eq.s32.totalorder %s31, 3
      %p92 = por %p90, %p91
      %p94 = scmp.ne.s32.totalorder %s77, %s93
      %p95 = scmp.eq.s32.totalorder %s31, 0
      %p96 = por %p94, %p95
      %s97 = ssub.s32 %s33, %s40
      %p98 = scmp.eq.s32.totalorder %s97, 0
      %s100 = sadd.s32 %s99, 1
      %s101 = scalar_select %p98, %s99, %s100
      %p104 = pneg %p98
      %p105 = scmp.eq.s32.totalorder %s25, 3
      %p106 = por %p104, %p105
      %p107 = scmp.ne.s32.totalorder %s99, %s102
      %p108 = scmp.eq.s32.totalorder %s25, 0
      %p109 = por %p107, %p108
      %p110 = scmp.ne.s32.totalorder %s99, %s102
      %p111 = scmp.eq.s32.totalorder %s30, 3
      %p112 = por %p110, %p111
      %p113 = scmp.ne.s32.totalorder %s102, %s103
      %p114 = scmp.eq.s32.totalorder %s30, 0
      %p115 = por %p113, %p114
      %p116 = scmp.ne.s32.totalorder %s102, %s103
      %p117 = scmp.eq.s32.totalorder %s31, 3
      %p118 = por %p116, %p117
      %p120 = scmp.ne.s32.totalorder %s103, %s119
      %p121 = scmp.eq.s32.totalorder %s31, 0
      %p122 = por %p120, %p121
      %s123 = ssub.s32 %s33, %s40
      %p124 = scmp.eq.s32.totalorder %s123, 0
      %s126 = sadd.s32 %s125, 1
      %s127 = scalar_select %p124, %s125, %s126
      %p130 = pneg %p124
      %p131 = scmp.eq.s32.totalorder %s25, 3
      %p132 = por %p130, %p131
      %p133 = scmp.ne.s32.totalorder %s125, %s128
      %p134 = scmp.eq.s32.totalorder %s25, 0
      %p135 = por %p133, %p134
      %p136 = scmp.ne.s32.totalorder %s125, %s128
      %p137 = scmp.eq.s32.totalorder %s30, 3
      %p138 = por %p136, %p137
      %p139 = scmp.ne.s32.totalorder %s128, %s129
      %p140 = scmp.eq.s32.totalorder %s30, 0
      %p141 = por %p139, %p140
      %p142 = scmp.ne.s32.totalorder %s128, %s129
      %p143 = scmp.eq.s32.totalorder %s31, 3
      %p144 = por %p142, %p143
      %p146 = scmp.ne.s32.totalorder %s129, %s145
      %p147 = scmp.eq.s32.totalorder %s31, 0
      %p148 = por %p146, %p147
      %s150 = sadd.s32 %s149, 1
      %p153 = scmp.eq.s32.totalorder %s25, 3
      %p154 = scmp.ne.s32.totalorder %s149, %s151
      %p155 = scmp.eq.s32.totalorder %s25, 0
      %p156 = por %p154, %p155
      %p157 = scmp.ne.s32.totalorder %s149, %s151
      %p158 = scmp.eq.s32.totalorder %s30, 3
      %p159 = por %p157, %p158
      %p160 = scmp.ne.s32.totalorder %s151, %s152
      %p161 = scmp.eq.s32.totalorder %s30, 0
      %p162 = por %p160, %p161
      %p163 = scmp.ne.s32.totalorder %s151, %s152
      %p164 = scmp.eq.s32.totalorder %s31, 3
      %p165 = por %p163, %p164
      %p167 = scmp.ne.s32.totalorder %s152, %s166
      %p168 = scmp.eq.s32.totalorder %s31, 0
      %p169 = por %p167, %p168
      %s171 = sadd.s32 %s170, 1
      %p174 = scmp.eq.s32.totalorder %s25, 3
      %p175 = scmp.ne.s32.totalorder %s170, %s172
      %p176 = scmp.eq.s32.totalorder %s25, 0
      %p177 = por %p175, %p176
      %p178 = scmp.ne.s32.totalorder %s170, %s172
      %p179 = scmp.eq.s32.totalorder %s30, 3
      %p180 = por %p178, %p179
      %p181 = scmp.ne.s32.totalorder %s172, %s173
      %p182 = scmp.eq.s32.totalorder %s30, 0
      %p183 = por %p181, %p182
      %p184 = scmp.ne.s32.totalorder %s172, %s173
      %p185 = scmp.eq.s32.totalorder %s31, 3
      %p186 = por %p184, %p185
      %p188 = scmp.ne.s32.totalorder %s173, %s187
      %p189 = scmp.eq.s32.totalorder %s31, 0
      %p190 = por %p188, %p189
      %s192 = sadd.s32 %s191, 1
      %p195 = scmp.eq.s32.totalorder %s25, 3
      %p196 = scmp.ne.s32.totalorder %s191, %s193
      %p197 = scmp.eq.s32.totalorder %s25, 0
      %p198 = por %p196, %p197
      %p199 = scmp.ne.s32.totalorder %s191, %s193
      %p200 = scmp.eq.s32.totalorder %s30, 3
      %p201 = por %p199, %p200
      %p202 = scmp.ne.s32.totalorder %s193, %s194
      %p203 = scmp.eq.s32.totalorder %s30, 0
      %p204 = por %p202, %p203
      %p205 = scmp.ne.s32.totalorder %s193, %s194
      %p206 = scmp.eq.s32.totalorder %s31, 3
      %p207 = por %p205, %p206
      %p209 = scmp.ne.s32.totalorder %s194, %s208
      %p210 = scmp.eq.s32.totalorder %s31, 0
      %p211 = por %p209, %p210
      %s212 = ssub.s32 %s32, %s44
      %p213 = scmp.eq.s32.totalorder %s212, 0
      %s215 = sadd.s32 %s214, 1
      %s216 = scalar_select %p213, %s214, %s215
      %p219 = pneg %p213
      %p220 = scmp.eq.s32.totalorder %s25, 3
      %p221 = por %p219, %p220
      %p222 = scmp.ne.s32.totalorder %s214, %s217
      %p223 = scmp.eq.s32.totalorder %s25, 0
      %p224 = por %p222, %p223
      %p225 = scmp.ne.s32.totalorder %s214, %s217
      %p226 = scmp.eq.s32.totalorder %s30, 3
      %p227 = por %p225, %p226
      %p228 = scmp.ne.s32.totalorder %s217, %s218
      %p229 = scmp.eq.s32.totalorder %s30, 0
      %p230 = por %p228, %p229
      %p231 = scmp.ne.s32.totalorder %s217, %s218
      %p232 = scmp.eq.s32.totalorder %s31, 3
      %p233 = por %p231, %p232
      %p235 = scmp.ne.s32.totalorder %s218, %s234
      %p236 = scmp.eq.s32.totalorder %s31, 0
      %p237 = por %p235, %p236
      %p238 = scmp.le.s32.totalorder 1, %s25
      %p239 = scmp.lt.s32.totalorder %s25, 5
      %p240 = pnand %p238, %p239
      %p241 = pneg %p240
      // Predicated region
      $region9: #{tpu_custom_call.1} parent=5 // pred_check
        _
      $region10: #{tpu_custom_call.1} parent=5 // pred_check_branch
        %243 = sbr.rel (%p240) target = $region12
      $region11: #{tpu_custom_call.1} parent=5 // pred_region
        %s244 = ssub.s32 %s25, 1
        // Predicated region
        $region13: #{tpu_custom_call.1} parent=11 // pred_check
          %p245 = pneg %p162
        $region14: #{tpu_custom_call.1} parent=11 // pred_check_branch
          %247 = sbr.rel (%p245) target = $region16
        $region15: #{tpu_custom_call.1} parent=11 // pred_region
          _
        $region16: #{tpu_custom_call.1} parent=11 // pred_fallthru
          _
        // Predicated region
        $region17: #{tpu_custom_call.1} parent=11 // pred_check
          %p248 = pneg %p183
        $region18: #{tpu_custom_call.1} parent=11 // pred_check_branch
          %250 = sbr.rel (%p248) target = $region20
        $region19: #{tpu_custom_call.1} parent=11 // pred_region
          _
        $region20: #{tpu_custom_call.1} parent=11 // pred_fallthru
          _
        // Predicated region
        $region21: #{tpu_custom_call.1} parent=11 // pred_check
          %p251 = pneg %p204
        $region22: #{tpu_custom_call.1} parent=11 // pred_check_branch
          %253 = sbr.rel (%p251) target = $region24
        $region23: #{tpu_custom_call.1} parent=11 // pred_region
          _
        $region24: #{tpu_custom_call.1} parent=11 // pred_fallthru
          _
      $region12: #{tpu_custom_call.1} parent=5 // pred_fallthru
        _
      %p254 = scmp.lt.s32.totalorder %s25, 4
      // Predicated region
      $region25: #{tpu_custom_call.1} parent=5 // pred_check
        %p255 = pneg %p254
      $region26: #{tpu_custom_call.1} parent=5 // pred_check_branch
        %257 = sbr.rel (%p255) target = $region28
      $region27: #{tpu_custom_call.1} parent=5 // pred_region
        // Predicated region
        $region29: #{tpu_custom_call.1} parent=27 // pred_check
          %p258 = pneg %p57
        $region30: #{tpu_custom_call.1} parent=27 // pred_check_branch
          %260 = sbr.rel (%p258) target = $region32
        $region31: #{tpu_custom_call.1} parent=27 // pred_region
          %s261 = sand.u32 %s47, 1
          %s262 = scalar_lea.sflag [#allocation4], %s261
          %s263 = sand.u32 %s47, 1
          %s264 = smul.addr %s263, 256
          %s265 = scalar_lea.vmem [#allocation3], %s264
          %s266 = smul.u32 32, %s32
          %s268 = ssub.s32 4096, 4096
          %269 = vsyncadd %s262, %s268
          %s270 = smul.addr %s266, 128
          %s271 = scalar_lea.hbm %s0, %s270
          %s272 = sshll.u32 %s265, 4
          %s273 = int_to_ptr.vmem [resolvable:$true] %s272
          %278 = dma.hbm_to_vmem [thread:$0]  %s271, 4096, %s273, %s262, 128, 128, 8
        $region32: #{tpu_custom_call.1} parent=27 // pred_fallthru
          _
        // Predicated region
        $region33: #{tpu_custom_call.1} parent=27 // pred_check
          %p279 = pneg %p83
        $region34: #{tpu_custom_call.1} parent=27 // pred_check_branch
          %281 = sbr.rel (%p279) target = $region36
        $region35: #{tpu_custom_call.1} parent=27 // pred_region
          %s282 = sand.u32 %s25, 1
          %s283 = scalar_lea.sflag [#allocation7], %s282
          %s284 = sand.u32 %s73, 1
          %s285 = smul.addr %s284, 256
          %s286 = scalar_lea.vmem [#allocation6], %s285
          %s287 = smul.u32 4, %s33
          %s289 = ssub.s32 4096, 4096
          %290 = vsyncadd %s283, %s289
          %s291 = smul.addr %s287, 64
          %s292 = scalar_lea.hbm %s1, %s291
          %s293 = sshll.u32 %s286, 4
          %s294 = int_to_ptr.vmem [resolvable:$true] %s293
          %299 = dma.hbm_to_vmem [thread:$0]  %s292, 4096, %s294, %s283, 512, 256, 16
        $region36: #{tpu_custom_call.1} parent=27 // pred_fallthru
          _
        // Predicated region
        $region37: #{tpu_custom_call.1} parent=27 // pred_check
          %p300 = pneg %p109
        $region38: #{tpu_custom_call.1} parent=27 // pred_check_branch
          %302 = sbr.rel (%p300) target = $region40
        $region39: #{tpu_custom_call.1} parent=27 // pred_region
          %s303 = sand.u32 %s25, 1
          %s304 = scalar_lea.sflag [#allocation7], %s303
          %s305 = sand.u32 %s99, 1
          %s306 = smul.addr %s305, 4
          %s307 = scalar_lea.vmem [#allocation8], %s306
          %s308 = smul.u32 4, %s33
          %s310 = ssub.s32 64, 64
          %311 = vsyncadd %s304, %s310
          %s312 = smul.addr %s308, 16
          %s313 = scalar_lea.hbm %s2, %s312
          %s315 = sshll.u32 %s307, 4
          %s316 = int_to_ptr.vmem [resolvable:$true] %s315
          %318 = dma.hbm_to_vmem [thread:$0]  %s313, 64, %s316, %s304
        $region40: #{tpu_custom_call.1} parent=27 // pred_fallthru
          _
        // Predicated region
        $region41: #{tpu_custom_call.1} parent=27 // pred_check
          %p319 = pneg %p135
        $region42: #{tpu_custom_call.1} parent=27 // pred_check_branch
          %321 = sbr.rel (%p319) target = $region44
        $region43: #{tpu_custom_call.1} parent=27 // pred_region
          %s322 = sand.u32 %s125, 1
          %s323 = scalar_lea.sflag [#allocation10], %s322
          %s324 = sand.u32 %s125, 1
          %s325 = smul.addr %s324, 256
          %s326 = scalar_lea.vmem [#allocation9], %s325
          %s327 = smul.u32 64, %s33
          %s329 = ssub.s32 4096, 4096
          %330 = vsyncadd %s323, %s329
          %s331 = smul.addr %s327, 64
          %s332 = scalar_lea.hbm %s3, %s331
          %s333 = sshll.u32 %s326, 4
          %s334 = int_to_ptr.vmem [resolvable:$true] %s333
          %339 = dma.hbm_to_vmem [thread:$0]  %s332, 4096, %s334, %s323, 64, 64, 4
        $region44: #{tpu_custom_call.1} parent=27 // pred_fallthru
          _
      $region28: #{tpu_custom_call.1} parent=5 // pred_fallthru
        _
      %p340 = scmp.le.s32.totalorder 1, %s25
      %p341 = scmp.lt.s32.totalorder %s25, 5
      %p342 = pnand %p340, %p341
      %p343 = pneg %p342
      // Predicated region
      $region45: #{tpu_custom_call.1} parent=5 // pred_check
        _
      $region46: #{tpu_custom_call.1} parent=5 // pred_check_branch
        %345 = sbr.rel (%p342) target = $region48
      $region47: #{tpu_custom_call.1} parent=5 // pred_region
        %s346 = ssub.s32 %s25, 1
        %s347 = sand.u32 %s50, 1
        %s348 = scalar_lea.sflag [#allocation4], %s347
        %s349 = sand.u32 %s50, 1
        %s350 = smul.addr %s349, 256
        %s351 = scalar_lea.vmem [#allocation3], %s350
        // Predicated region
        $region49: #{tpu_custom_call.1} parent=47 // pred_check
          %p352 = pneg %p63
        $region50: #{tpu_custom_call.1} parent=47 // pred_check_branch
          %354 = sbr.rel (%p352) target = $region52
        $region51: #{tpu_custom_call.1} parent=47 // pred_region
          %355 = dma.done %s348, 4096
        $region52: #{tpu_custom_call.1} parent=47 // pred_fallthru
          _
        %s356 = sand.u32 %s30, 1
        %s357 = scalar_lea.sflag [#allocation7], %s356
        %s358 = sand.u32 %s76, 1
        %s359 = smul.addr %s358, 256
        %s360 = scalar_lea.vmem [#allocation6], %s359
        // Predicated region
        $region53: #{tpu_custom_call.1} parent=47 // pred_check
          %p361 = pneg %p89
        $region54: #{tpu_custom_call.1} parent=47 // pred_check_branch
          %363 = sbr.rel (%p361) target = $region56
        $region55: #{tpu_custom_call.1} parent=47 // pred_region
          %364 = dma.done %s357, 4096
        $region56: #{tpu_custom_call.1} parent=47 // pred_fallthru
          _
        %s365 = sand.u32 %s30, 1
        %s366 = scalar_lea.sflag [#allocation7], %s365
        %s367 = sand.u32 %s102, 1
        %s368 = smul.addr %s367, 4
        %s369 = scalar_lea.vmem [#allocation8], %s368
        // Predicated region
        $region57: #{tpu_custom_call.1} parent=47 // pred_check
          %p370 = pneg %p115
        $region58: #{tpu_custom_call.1} parent=47 // pred_check_branch
          %372 = sbr.rel (%p370) target = $region60
        $region59: #{tpu_custom_call.1} parent=47 // pred_region
          %373 = dma.done %s366, 64
        $region60: #{tpu_custom_call.1} parent=47 // pred_fallthru
          _
        %s374 = sand.u32 %s128, 1
        %s375 = scalar_lea.sflag [#allocation10], %s374
        %s376 = sand.u32 %s128, 1
        %s377 = smul.addr %s376, 256
        %s378 = scalar_lea.vmem [#allocation9], %s377
        // Predicated region
        $region61: #{tpu_custom_call.1} parent=47 // pred_check
          %p379 = pneg %p141
        $region62: #{tpu_custom_call.1} parent=47 // pred_check_branch
          %381 = sbr.rel (%p379) target = $region64
        $region63: #{tpu_custom_call.1} parent=47 // pred_region
          %382 = dma.done %s375, 4096
        $region64: #{tpu_custom_call.1} parent=47 // pred_fallthru
          _
        %s383 = sand.u32 %s50, 1
        %s384 = scalar_lea.sflag [#allocation4], %s383
        %s385 = sand.u32 %s50, 1
        %s386 = smul.addr %s385, 256
        %s387 = scalar_lea.vmem [#allocation3], %s386
        %p388 = pneg %p63
        %p389 = pneg %p60
        %s390 = sand.u32 %s30, 1
        %s391 = scalar_lea.sflag [#allocation7], %s390
        %s392 = sand.u32 %s76, 1
        %s393 = smul.addr %s392, 256
        %s394 = scalar_lea.vmem [#allocation6], %s393
        %p395 = pneg %p89
        %p396 = pneg %p86
        %s397 = sand.u32 %s30, 1
        %s398 = scalar_lea.sflag [#allocation7], %s397
        %s399 = sand.u32 %s102, 1
        %s400 = smul.addr %s399, 4
        %s401 = scalar_lea.vmem [#allocation8], %s400
        %p402 = pneg %p115
        %p403 = pneg %p112
        %s404 = sand.u32 %s128, 1
        %s405 = scalar_lea.sflag [#allocation10], %s404
        %s406 = sand.u32 %s128, 1
        %s407 = smul.addr %s406, 256
        %s408 = scalar_lea.vmem [#allocation9], %s407
        %p409 = pneg %p141
        %p410 = pneg %p138
        %p411 = pneg %p162
        %p412 = pneg %p159
        %p413 = pneg %p183
        %p414 = pneg %p180
        %p415 = pneg %p204
        %p416 = pneg %p201
        %p417 = pneg %p230
        %p418 = pneg %p227
        %s419 = sand.u32 %s217, 1
        %s420 = scalar_lea.sflag [#allocation5], %s419
        %s421 = sand.u32 %s217, 1
        %s422 = smul.addr %s421, 256
        %s423 = scalar_lea.vmem [#allocation11], %s422
        %s424 = smul.u32 32, %s34
        %s425 = smul.u32 4, %s35
        %s426 = smul.u32 4, %s35
        %s427 = smul.u32 64, %s35
        %s428 = smul.u32 32, %s34
        %p430 = scmp.eq.s32.totalorder %s35, 0
        // Predicated region
        $region65: #{tpu_custom_call.1} parent=47 // pred_check
          %p431 = pneg %p430
        $region66: #{tpu_custom_call.1} parent=47 // pred_check_branch
          %433 = sbr.rel (%p431) target = $region68
        $region67: #{tpu_custom_call.1} parent=47 // pred_region
          %434 = vst [vmem:[#allocation2] sm:$0xff] 0.0
          %435 = vst [vmem:[#allocation2 + $0x8] sm:$0xff] 0.0
          %436 = vst [vmem:[#allocation2 + $0x10] sm:$0xff] 0.0
          %437 = vst [vmem:[#allocation2 + $0x18] sm:$0xff] 0.0
          %438 = vst [vmem:[#allocation2 + $0x20] sm:$0xff] 0.0
          %439 = vst [vmem:[#allocation2 + $0x28] sm:$0xff] 0.0
          %440 = vst [vmem:[#allocation2 + $0x30] sm:$0xff] 0.0
          %441 = vst [vmem:[#allocation2 + $0x38] sm:$0xff] 0.0
          %442 = vst [vmem:[#allocation2 + $0x40] sm:$0xff] 0.0
          %443 = vst [vmem:[#allocation2 + $0x48] sm:$0xff] 0.0
          %444 = vst [vmem:[#allocation2 + $0x50] sm:$0xff] 0.0
          %445 = vst [vmem:[#allocation2 + $0x58] sm:$0xff] 0.0
          %446 = vst [vmem:[#allocation2 + $0x60] sm:$0xff] 0.0
          %447 = vst [vmem:[#allocation2 + $0x68] sm:$0xff] 0.0
          %448 = vst [vmem:[#allocation2 + $0x70] sm:$0xff] 0.0
          %449 = vst [vmem:[#allocation2 + $0x78] sm:$0xff] 0.0
          %450 = vst [vmem:[#allocation2 + $0x80] sm:$0xff] 0.0
          %451 = vst [vmem:[#allocation2 + $0x88] sm:$0xff] 0.0
          %452 = vst [vmem:[#allocation2 + $0x90] sm:$0xff] 0.0
          %453 = vst [vmem:[#allocation2 + $0x98] sm:$0xff] 0.0
          %454 = vst [vmem:[#allocation2 + $0xa0] sm:$0xff] 0.0
          %455 = vst [vmem:[#allocation2 + $0xa8] sm:$0xff] 0.0
          %456 = vst [vmem:[#allocation2 + $0xb0] sm:$0xff] 0.0
          %457 = vst [vmem:[#allocation2 + $0xb8] sm:$0xff] 0.0
          %458 = vst [vmem:[#allocation2 + $0xc0] sm:$0xff] 0.0
          %459 = vst [vmem:[#allocation2 + $0xc8] sm:$0xff] 0.0
          %460 = vst [vmem:[#allocation2 + $0xd0] sm:$0xff] 0.0
          %461 = vst [vmem:[#allocation2 + $0xd8] sm:$0xff] 0.0
          %462 = vst [vmem:[#allocation2 + $0xe0] sm:$0xff] 0.0
          %463 = vst [vmem:[#allocation2 + $0xe8] sm:$0xff] 0.0
          %464 = vst [vmem:[#allocation2 + $0xf0] sm:$0xff] 0.0
          %465 = vst [vmem:[#allocation2 + $0xf8] sm:$0xff] 0.0
        $region68: #{tpu_custom_call.1} parent=47 // pred_fallthru
          _
        %v466 = vld [vmem:[%s351] sm:$0xff]
        %v467 = vld [vmem:[%s351 + $0x8] sm:$0xff]
        %v468 = vld [vmem:[%s351 + $0x10] sm:$0xff]
        %v469 = vld [vmem:[%s351 + $0x18] sm:$0xff]
        %v470 = vld [vmem:[%s351 + $0x20] sm:$0xff]
        %v471 = vld [vmem:[%s351 + $0x28] sm:$0xff]
        %v472 = vld [vmem:[%s351 + $0x30] sm:$0xff]
        %v473 = vld [vmem:[%s351 + $0x38] sm:$0xff]
        %v474 = vld [vmem:[%s351 + $0x40] sm:$0xff]
        %v475 = vld [vmem:[%s351 + $0x48] sm:$0xff]
        %v476 = vld [vmem:[%s351 + $0x50] sm:$0xff]
        %v477 = vld [vmem:[%s351 + $0x58] sm:$0xff]
        %v478 = vld [vmem:[%s351 + $0x60] sm:$0xff]
        %v479 = vld [vmem:[%s351 + $0x68] sm:$0xff]
        %v480 = vld [vmem:[%s351 + $0x70] sm:$0xff]
        %v481 = vld [vmem:[%s351 + $0x78] sm:$0xff]
        %v482 = vld [vmem:[%s351 + $0x80] sm:$0xff]
        %v483 = vld [vmem:[%s351 + $0x88] sm:$0xff]
        %v484 = vld [vmem:[%s351 + $0x90] sm:$0xff]
        %v485 = vld [vmem:[%s351 + $0x98] sm:$0xff]
        %v486 = vld [vmem:[%s351 + $0xa0] sm:$0xff]
        %v487 = vld [vmem:[%s351 + $0xa8] sm:$0xff]
        %v488 = vld [vmem:[%s351 + $0xb0] sm:$0xff]
        %v489 = vld [vmem:[%s351 + $0xb8] sm:$0xff]
        %v490 = vld [vmem:[%s351 + $0xc0] sm:$0xff]
        %v491 = vld [vmem:[%s351 + $0xc8] sm:$0xff]
        %v492 = vld [vmem:[%s351 + $0xd0] sm:$0xff]
        %v493 = vld [vmem:[%s351 + $0xd8] sm:$0xff]
        %v494 = vld [vmem:[%s351 + $0xe0] sm:$0xff]
        %v495 = vld [vmem:[%s351 + $0xe8] sm:$0xff]
        %v496 = vld [vmem:[%s351 + $0xf0] sm:$0xff]
        %v497 = vld [vmem:[%s351 + $0xf8] sm:$0xff]
        %v498 = vpack.c.bf16 %v467, %v466
        %v499 = vpack.c.bf16 %v469, %v468
        %v500 = vpack.c.bf16 %v471, %v470
        %v501 = vpack.c.bf16 %v473, %v472
        %v502 = vpack.c.bf16 %v475, %v474
        %v503 = vpack.c.bf16 %v477, %v476
        %v504 = vpack.c.bf16 %v479, %v478
        %v505 = vpack.c.bf16 %v481, %v480
        %v506 = vpack.c.bf16 %v483, %v482
        %v507 = vpack.c.bf16 %v485, %v484
        %v508 = vpack.c.bf16 %v487, %v486
        %v509 = vpack.c.bf16 %v489, %v488
        %v510 = vpack.c.bf16 %v491, %v490
        %v511 = vpack.c.bf16 %v493, %v492
        %v512 = vpack.c.bf16 %v495, %v494
        %v513 = vpack.c.bf16 %v497, %v496
        %v514 = vld [vmem:[%s360] sm:$0xff]
        %v515 = vld [vmem:[%s360 + $0x8] sm:$0xff]
        %v516 = vld [vmem:[%s360 + $0x10] sm:$0xff]
        %v517 = vld [vmem:[%s360 + $0x18] sm:$0xff]
        %v518 = vld [vmem:[%s360 + $0x20] sm:$0xff]
        %v519 = vld [vmem:[%s360 + $0x28] sm:$0xff]
        %v520 = vld [vmem:[%s360 + $0x30] sm:$0xff]
        %v521 = vld [vmem:[%s360 + $0x38] sm:$0xff]
        %v522 = vld [vmem:[%s360 + $0x40] sm:$0xff]
        %v523 = vld [vmem:[%s360 + $0x48] sm:$0xff]
        %v524 = vld [vmem:[%s360 + $0x50] sm:$0xff]
        %v525 = vld [vmem:[%s360 + $0x58] sm:$0xff]
        %v526 = vld [vmem:[%s360 + $0x60] sm:$0xff]
        %v527 = vld [vmem:[%s360 + $0x68] sm:$0xff]
        %v528 = vld [vmem:[%s360 + $0x70] sm:$0xff]
        %v529 = vld [vmem:[%s360 + $0x78] sm:$0xff]
        %v530 = vld [vmem:[%s360 + $0x80] sm:$0xff]
        %v531 = vld [vmem:[%s360 + $0x88] sm:$0xff]
        %v532 = vld [vmem:[%s360 + $0x90] sm:$0xff]
        %v533 = vld [vmem:[%s360 + $0x98] sm:$0xff]
        %v534 = vld [vmem:[%s360 + $0xa0] sm:$0xff]
        %v535 = vld [vmem:[%s360 + $0xa8] sm:$0xff]
        %v536 = vld [vmem:[%s360 + $0xb0] sm:$0xff]
        %v537 = vld [vmem:[%s360 + $0xb8] sm:$0xff]
        %v538 = vld [vmem:[%s360 + $0xc0] sm:$0xff]
        %v539 = vld [vmem:[%s360 + $0xc8] sm:$0xff]
        %v540 = vld [vmem:[%s360 + $0xd0] sm:$0xff]
        %v541 = vld [vmem:[%s360 + $0xd8] sm:$0xff]
        %v542 = vld [vmem:[%s360 + $0xe0] sm:$0xff]
        %v543 = vld [vmem:[%s360 + $0xe8] sm:$0xff]
        %v544 = vld [vmem:[%s360 + $0xf0] sm:$0xff]
        %v545 = vld [vmem:[%s360 + $0xf8] sm:$0xff]
        %v546 = vld [vmem:[%s369] sm:$0xf]
        %v548 = vlaneseq
        %v549 = vshrl.u32 %v548, 7
        %v550 = vsub.s32 0, %v549
        %v551 = vrot.slane %v546, %v550
        %v552 = vlaneseq
        %v553 = vshrl.u32 %v552, 7
        %v554 = vsub.s32 1, %v553
        %v555 = vrot.slane %v546, %v554
        %v556 = vlaneseq
        %v557 = vshrl.u32 %v556, 7
        %v558 = vsub.s32 2, %v557
        %v559 = vrot.slane %v546, %v558
        %v560 = vlaneseq
        %v561 = vshrl.u32 %v560, 7
        %v562 = vsub.s32 3, %v561
        %v563 = vrot.slane %v546, %v562
        %v600 = vunpack.c.l.b16 %v514
        %v601 = vunpack.c.h.b16 %v514
        %v602 = vunpack.c.l.b16 %v515
        %v603 = vunpack.c.h.b16 %v515
        %v604 = vunpack.c.l.b16 %v516
        %v605 = vunpack.c.h.b16 %v516
        %v606 = vunpack.c.l.b16 %v517
        %v607 = vunpack.c.h.b16 %v517
        %v608 = vunpack.c.l.b16 %v518
        %v609 = vunpack.c.h.b16 %v518
        %v610 = vunpack.c.l.b16 %v519
        %v611 = vunpack.c.h.b16 %v519
        %v612 = vunpack.c.l.b16 %v520
        %v613 = vunpack.c.h.b16 %v520
        %v614 = vunpack.c.l.b16 %v521
        %v615 = vunpack.c.h.b16 %v521
        %v616 = vunpack.c.l.b16 %v522
        %v617 = vunpack.c.h.b16 %v522
        %v618 = vunpack.c.l.b16 %v523
        %v619 = vunpack.c.h.b16 %v523
        %v620 = vunpack.c.l.b16 %v524
        %v621 = vunpack.c.h.b16 %v524
        %v622 = vunpack.c.l.b16 %v525
        %v623 = vunpack.c.h.b16 %v525
        %v624 = vunpack.c.l.b16 %v526
        %v625 = vunpack.c.h.b16 %v526
        %v626 = vunpack.c.l.b16 %v527
        %v627 = vunpack.c.h.b16 %v527
        %v628 = vunpack.c.l.b16 %v528
        %v629 = vunpack.c.h.b16 %v528
        %v630 = vunpack.c.l.b16 %v529
        %v631 = vunpack.c.h.b16 %v529
        %v632 = vunpack.c.l.b16 %v530
        %v633 = vunpack.c.h.b16 %v530
        %v634 = vunpack.c.l.b16 %v531
        %v635 = vunpack.c.h.b16 %v531
        %v636 = vunpack.c.l.b16 %v532
        %v637 = vunpack.c.h.b16 %v532
        %v638 = vunpack.c.l.b16 %v533
        %v639 = vunpack.c.h.b16 %v533
        %v640 = vunpack.c.l.b16 %v534
        %v641 = vunpack.c.h.b16 %v534
        %v642 = vunpack.c.l.b16 %v535
        %v643 = vunpack.c.h.b16 %v535
        %v644 = vunpack.c.l.b16 %v536
        %v645 = vunpack.c.h.b16 %v536
        %v646 = vunpack.c.l.b16 %v537
        %v647 = vunpack.c.h.b16 %v537
        %v648 = vunpack.c.l.b16 %v538
        %v649 = vunpack.c.h.b16 %v538
        %v650 = vunpack.c.l.b16 %v539
        %v651 = vunpack.c.h.b16 %v539
        %v652 = vunpack.c.l.b16 %v540
        %v653 = vunpack.c.h.b16 %v540
        %v654 = vunpack.c.l.b16 %v541
        %v655 = vunpack.c.h.b16 %v541
        %v656 = vunpack.c.l.b16 %v542
        %v657 = vunpack.c.h.b16 %v542
        %v658 = vunpack.c.l.b16 %v543
        %v659 = vunpack.c.h.b16 %v543
        %v660 = vunpack.c.l.b16 %v544
        %v661 = vunpack.c.h.b16 %v544
        %v662 = vunpack.c.l.b16 %v545
        %v663 = vunpack.c.h.b16 %v545
        %v664 = vpack.c.b16 %v604, %v600
        %v665 = vpack.c.b16 %v605, %v601
        %v666 = vpack.c.b16 %v606, %v602
        %v667 = vpack.c.b16 %v607, %v603
        %v668 = vpack.c.b16 %v612, %v608
        %v669 = vpack.c.b16 %v613, %v609
        %v670 = vpack.c.b16 %v614, %v610
        %v671 = vpack.c.b16 %v615, %v611
        %v672 = vpack.c.b16 %v620, %v616
        %v673 = vpack.c.b16 %v621, %v617
        %v674 = vpack.c.b16 %v622, %v618
        %v675 = vpack.c.b16 %v623, %v619
        %v676 = vpack.c.b16 %v628, %v624
        %v677 = vpack.c.b16 %v629, %v625
        %v678 = vpack.c.b16 %v630, %v626
        %v679 = vpack.c.b16 %v631, %v627
        %v680 = vpack.c.b16 %v636, %v632
        %v681 = vpack.c.b16 %v637, %v633
        %v682 = vpack.c.b16 %v638, %v634
        %v683 = vpack.c.b16 %v639, %v635
        %v684 = vpack.c.b16 %v644, %v640
        %v685 = vpack.c.b16 %v645, %v641
        %v686 = vpack.c.b16 %v646, %v642
        %v687 = vpack.c.b16 %v647, %v643
        %v688 = vpack.c.b16 %v652, %v648
        %v689 = vpack.c.b16 %v653, %v649
        %v690 = vpack.c.b16 %v654, %v650
        %v691 = vpack.c.b16 %v655, %v651
        %v692 = vpack.c.b16 %v660, %v656
        %v693 = vpack.c.b16 %v661, %v657
        %v694 = vpack.c.b16 %v662, %v658
        %v695 = vpack.c.b16 %v663, %v659
        %728 = vmatprep.subr.bf16.mxu0 %v693
        %729 = vmatpush1.bf16.msra.mxu0 %v692
        %730 = vmatprep.subr.bf16.mxu0 %v689
        %731 = vmatpush1.bf16.msra.mxu0 %v688
        %732 = vmatprep.subr.bf16.mxu0 %v685
        %733 = vmatpush1.bf16.msra.mxu0 %v684
        %734 = vmatprep.subr.bf16.mxu0 %v681
        %735 = vmatpush1.bf16.msra.mxu0 %v680
        %736 = vmatprep.subr.bf16.mxu0 %v677
        %737 = vmatpush1.bf16.msra.mxu0 %v676
        %738 = vmatprep.subr.bf16.mxu0 %v673
        %739 = vmatpush1.bf16.msra.mxu0 %v672
        %740 = vmatprep.subr.bf16.mxu0 %v669
        %741 = vmatpush1.bf16.msra.mxu0 %v668
        %742 = vmatprep.subr.bf16.mxu0 %v665
        %743 = vmatpush1.bf16.msra.mxu0 %v664
        %744 = vmatprep.subr.bf16.mxu0 0
        %745 = vmatpush2.bf16.msra.mxu0 0
        %746 = vmatprep.subr.bf16.mxu0 0
        %747 = vmatpush2.bf16.msra.mxu0 0
        %748 = vmatprep.subr.bf16.mxu0 0
        %749 = vmatpush2.bf16.msra.mxu0 0
        %750 = vmatprep.subr.bf16.mxu0 0
        %751 = vmatpush2.bf16.msra.mxu0 0
        %752 = vmatprep.subr.bf16.mxu0 0
        %753 = vmatpush2.bf16.msra.mxu0 0
        %754 = vmatprep.subr.bf16.mxu0 0
        %755 = vmatpush2.bf16.msra.mxu0 0
        %756 = vmatprep.subr.bf16.mxu0 0
        %757 = vmatpush2.bf16.msra.mxu0 0
        %758 = vmatprep.subr.bf16.mxu0 0
        %759 = vmatpush2.bf16.msra.mxu0 0
        %760 = vmatprep.mubr.bf16.mxu0 0
        %761 = vmatmul.mubr.bf16.gmra.mxu0 %v498
        %v762 = vpop.f32.mrf.mxu0
        %v763 = vadd.f32 %v551, %v762
        %v764 = vpop.f32.mrf.mxu0
        %v765 = vadd.f32 %v555, %v764
        %v766 = vpop.f32.mrf.mxu0
        %v767 = vadd.f32 %v551, %v766
        %v768 = vpop.f32.mrf.mxu0
        %v769 = vadd.f32 %v555, %v768
        %770 = vmatprep.mubr.bf16.mxu0 0
        %771 = vmatmul.mubr.bf16.gmra.mxu0 %v499
        %v772 = vpop.f32.mrf.mxu0
        %v773 = vadd.f32 %v551, %v772
        %v774 = vpop.f32.mrf.mxu0
        %v775 = vadd.f32 %v555, %v774
        %v776 = vpop.f32.mrf.mxu0
        %v777 = vadd.f32 %v551, %v776
        %v778 = vpop.f32.mrf.mxu0
        %v779 = vadd.f32 %v555, %v778
        %780 = vmatprep.mubr.bf16.mxu0 0
        %781 = vmatmul.mubr.bf16.gmra.mxu0 %v500
        %v782 = vpop.f32.mrf.mxu0
        %v783 = vadd.f32 %v551, %v782
        %v784 = vpop.f32.mrf.mxu0
        %v785 = vadd.f32 %v555, %v784
        %v786 = vpop.f32.mrf.mxu0
        %v787 = vadd.f32 %v551, %v786
        %v788 = vpop.f32.mrf.mxu0
        %v789 = vadd.f32 %v555, %v788
        %790 = vmatprep.mubr.bf16.mxu0 0
        %791 = vmatmul.mubr.bf16.gmra.mxu0 %v501
        %v792 = vpop.f32.mrf.mxu0
        %v793 = vadd.f32 %v551, %v792
        %v794 = vpop.f32.mrf.mxu0
        %v795 = vadd.f32 %v555, %v794
        %v796 = vpop.f32.mrf.mxu0
        %v797 = vadd.f32 %v551, %v796
        %v798 = vpop.f32.mrf.mxu0
        %v799 = vadd.f32 %v555, %v798
        %800 = vmatprep.mubr.bf16.mxu0 0
        %801 = vmatmul.mubr.bf16.gmra.mxu0 %v502
        %v802 = vpop.f32.mrf.mxu0
        %v803 = vadd.f32 %v551, %v802
        %v804 = vpop.f32.mrf.mxu0
        %v805 = vadd.f32 %v555, %v804
        %v806 = vpop.f32.mrf.mxu0
        %v807 = vadd.f32 %v551, %v806
        %v808 = vpop.f32.mrf.mxu0
        %v809 = vadd.f32 %v555, %v808
        %810 = vmatprep.mubr.bf16.mxu0 0
        %811 = vmatmul.mubr.bf16.gmra.mxu0 %v503
        %v812 = vpop.f32.mrf.mxu0
        %v813 = vadd.f32 %v551, %v812
        %v814 = vpop.f32.mrf.mxu0
        %v815 = vadd.f32 %v555, %v814
        %v816 = vpop.f32.mrf.mxu0
        %v817 = vadd.f32 %v551, %v816
        %v818 = vpop.f32.mrf.mxu0
        %v819 = vadd.f32 %v555, %v818
        %820 = vmatprep.mubr.bf16.mxu0 0
        %821 = vmatmul.mubr.bf16.gmra.mxu0 %v504
        %v822 = vpop.f32.mrf.mxu0
        %v823 = vadd.f32 %v551, %v822
        %v824 = vpop.f32.mrf.mxu0
        %v825 = vadd.f32 %v555, %v824
        %v826 = vpop.f32.mrf.mxu0
        %v827 = vadd.f32 %v551, %v826
        %v828 = vpop.f32.mrf.mxu0
        %v829 = vadd.f32 %v555, %v828
        %830 = vmatprep.mubr.bf16.mxu0 0
        %831 = vmatmul.mubr.bf16.gmra.mxu0 %v505
        %v832 = vpop.f32.mrf.mxu0
        %v833 = vadd.f32 %v551, %v832
        %v834 = vpop.f32.mrf.mxu0
        %v835 = vadd.f32 %v555, %v834
        %v836 = vpop.f32.mrf.mxu0
        %v837 = vadd.f32 %v551, %v836
        %v838 = vpop.f32.mrf.mxu0
        %v839 = vadd.f32 %v555, %v838
        %840 = vmatprep.mubr.bf16.mxu0 0
        %841 = vmatmul.mubr.bf16.gmra.mxu0 %v506
        %v842 = vpop.f32.mrf.mxu0
        %v843 = vadd.f32 %v551, %v842
        %v844 = vpop.f32.mrf.mxu0
        %v845 = vadd.f32 %v555, %v844
        %v846 = vpop.f32.mrf.mxu0
        %v847 = vadd.f32 %v551, %v846
        %v848 = vpop.f32.mrf.mxu0
        %v849 = vadd.f32 %v555, %v848
        %850 = vmatprep.mubr.bf16.mxu0 0
        %851 = vmatmul.mubr.bf16.gmra.mxu0 %v507
        %v852 = vpop.f32.mrf.mxu0
        %v853 = vadd.f32 %v551, %v852
        %v854 = vpop.f32.mrf.mxu0
        %v855 = vadd.f32 %v555, %v854
        %v856 = vpop.f32.mrf.mxu0
        %v857 = vadd.f32 %v551, %v856
        %v858 = vpop.f32.mrf.mxu0
        %v859 = vadd.f32 %v555, %v858
        %860 = vmatprep.mubr.bf16.mxu0 0
        %861 = vmatmul.mubr.bf16.gmra.mxu0 %v508
        %v862 = vpop.f32.mrf.mxu0
        %v863 = vadd.f32 %v551, %v862
        %v864 = vpop.f32.mrf.mxu0
        %v865 = vadd.f32 %v555, %v864
        %v866 = vpop.f32.mrf.mxu0
        %v867 = vadd.f32 %v551, %v866
        %v868 = vpop.f32.mrf.mxu0
        %v869 = vadd.f32 %v555, %v868
        %870 = vmatprep.mubr.bf16.mxu0 0
        %871 = vmatmul.mubr.bf16.gmra.mxu0 %v509
        %v872 = vpop.f32.mrf.mxu0
        %v873 = vadd.f32 %v551, %v872
        %v874 = vpop.f32.mrf.mxu0
        %v875 = vadd.f32 %v555, %v874
        %v876 = vpop.f32.mrf.mxu0
        %v877 = vadd.f32 %v551, %v876
        %v878 = vpop.f32.mrf.mxu0
        %v879 = vadd.f32 %v555, %v878
        %880 = vmatprep.mubr.bf16.mxu0 0
        %881 = vmatmul.mubr.bf16.gmra.mxu0 %v510
        %v882 = vpop.f32.mrf.mxu0
        %v883 = vadd.f32 %v551, %v882
        %v884 = vpop.f32.mrf.mxu0
        %v885 = vadd.f32 %v555, %v884
        %v886 = vpop.f32.mrf.mxu0
        %v887 = vadd.f32 %v551, %v886
        %v888 = vpop.f32.mrf.mxu0
        %v889 = vadd.f32 %v555, %v888
        %890 = vmatprep.mubr.bf16.mxu0 0
        %891 = vmatmul.mubr.bf16.gmra.mxu0 %v511
        %v892 = vpop.f32.mrf.mxu0
        %v893 = vadd.f32 %v551, %v892
        %v894 = vpop.f32.mrf.mxu0
        %v895 = vadd.f32 %v555, %v894
        %v896 = vpop.f32.mrf.mxu0
        %v897 = vadd.f32 %v551, %v896
        %v898 = vpop.f32.mrf.mxu0
        %v899 = vadd.f32 %v555, %v898
        %900 = vmatprep.mubr.bf16.mxu0 0
        %901 = vmatmul.mubr.bf16.gmra.mxu0 %v512
        %v902 = vpop.f32.mrf.mxu0
        %v903 = vadd.f32 %v551, %v902
        %v904 = vpop.f32.mrf.mxu0
        %v905 = vadd.f32 %v555, %v904
        %v906 = vpop.f32.mrf.mxu0
        %v907 = vadd.f32 %v551, %v906
        %v908 = vpop.f32.mrf.mxu0
        %v909 = vadd.f32 %v555, %v908
        %910 = vmatprep.mubr.bf16.mxu0 0
        %911 = vmatmul.mubr.bf16.gmra.mxu0 %v513
        %v912 = vpop.f32.mrf.mxu0
        %v913 = vadd.f32 %v551, %v912
        %v914 = vpop.f32.mrf.mxu0
        %v915 = vadd.f32 %v555, %v914
        %v916 = vpop.f32.mrf.mxu0
        %v917 = vadd.f32 %v551, %v916
        %v918 = vpop.f32.mrf.mxu0
        %v919 = vadd.f32 %v555, %v918
        %920 = vdwg.mxu0
        %921 = vmatprep.subr.bf16.mxu0 %v695
        %922 = vmatpush1.bf16.msra.mxu0 %v694
        %923 = vmatprep.subr.bf16.mxu0 %v691
        %924 = vmatpush1.bf16.msra.mxu0 %v690
        %925 = vmatprep.subr.bf16.mxu0 %v687
        %926 = vmatpush1.bf16.msra.mxu0 %v686
        %927 = vmatprep.subr.bf16.mxu0 %v683
        %928 = vmatpush1.bf16.msra.mxu0 %v682
        %929 = vmatprep.subr.bf16.mxu0 %v679
        %930 = vmatpush1.bf16.msra.mxu0 %v678
        %931 = vmatprep.subr.bf16.mxu0 %v675
        %932 = vmatpush1.bf16.msra.mxu0 %v674
        %933 = vmatprep.subr.bf16.mxu0 %v671
        %934 = vmatpush1.bf16.msra.mxu0 %v670
        %935 = vmatprep.subr.bf16.mxu0 %v667
        %936 = vmatpush1.bf16.msra.mxu0 %v666
        %937 = vmatprep.subr.bf16.mxu0 0
        %938 = vmatpush2.bf16.msra.mxu0 0
        %939 = vmatprep.subr.bf16.mxu0 0
        %940 = vmatpush2.bf16.msra.mxu0 0
        %941 = vmatprep.subr.bf16.mxu0 0
        %942 = vmatpush2.bf16.msra.mxu0 0
        %943 = vmatprep.subr.bf16.mxu0 0
        %944 = vmatpush2.bf16.msra.mxu0 0
        %945 = vmatprep.subr.bf16.mxu0 0
        %946 = vmatpush2.bf16.msra.mxu0 0
        %947 = vmatprep.subr.bf16.mxu0 0
        %948 = vmatpush2.bf16.msra.mxu0 0
        %949 = vmatprep.subr.bf16.mxu0 0
        %950 = vmatpush2.bf16.msra.mxu0 0
        %951 = vmatprep.subr.bf16.mxu0 0
        %952 = vmatpush2.bf16.msra.mxu0 0
        %953 = vmatprep.mubr.bf16.mxu0 0
        %954 = vmatmul.mubr.bf16.gmra.mxu0 %v498
        %v955 = vpop.f32.mrf.mxu0
        %v956 = vadd.f32 %v559, %v955
        %v957 = vpop.f32.mrf.mxu0
        %v958 = vadd.f32 %v563, %v957
        %v959 = vpop.f32.mrf.mxu0
        %v960 = vadd.f32 %v559, %v959
        %v961 = vpop.f32.mrf.mxu0
        %v962 = vadd.f32 %v563, %v961
        %963 = vmatprep.mubr.bf16.mxu0 0
        %964 = vmatmul.mubr.bf16.gmra.mxu0 %v499
        %v965 = vpop.f32.mrf.mxu0
        %v966 = vadd.f32 %v559, %v965
        %v967 = vpop.f32.mrf.mxu0
        %v968 = vadd.f32 %v563, %v967
        %v969 = vpop.f32.mrf.mxu0
        %v970 = vadd.f32 %v559, %v969
        %v971 = vpop.f32.mrf.mxu0
        %v972 = vadd.f32 %v563, %v971
        %973 = vmatprep.mubr.bf16.mxu0 0
        %974 = vmatmul.mubr.bf16.gmra.mxu0 %v500
        %v975 = vpop.f32.mrf.mxu0
        %v976 = vadd.f32 %v559, %v975
        %v977 = vpop.f32.mrf.mxu0
        %v978 = vadd.f32 %v563, %v977
        %v979 = vpop.f32.mrf.mxu0
        %v980 = vadd.f32 %v559, %v979
        %v981 = vpop.f32.mrf.mxu0
        %v982 = vadd.f32 %v563, %v981
        %983 = vmatprep.mubr.bf16.mxu0 0
        %984 = vmatmul.mubr.bf16.gmra.mxu0 %v501
        %v985 = vpop.f32.mrf.mxu0
        %v986 = vadd.f32 %v559, %v985
        %v987 = vpop.f32.mrf.mxu0
        %v988 = vadd.f32 %v563, %v987
        %v989 = vpop.f32.mrf.mxu0
        %v990 = vadd.f32 %v559, %v989
        %v991 = vpop.f32.mrf.mxu0
        %v992 = vadd.f32 %v563, %v991
        %993 = vmatprep.mubr.bf16.mxu0 0
        %994 = vmatmul.mubr.bf16.gmra.mxu0 %v502
        %v995 = vpop.f32.mrf.mxu0
        %v996 = vadd.f32 %v559, %v995
        %v997 = vpop.f32.mrf.mxu0
        %v998 = vadd.f32 %v563, %v997
        %v999 = vpop.f32.mrf.mxu0
        %v1000 = vadd.f32 %v559, %v999
        %v1001 = vpop.f32.mrf.mxu0
        %v1002 = vadd.f32 %v563, %v1001
        %1003 = vmatprep.mubr.bf16.mxu0 0
        %1004 = vmatmul.mubr.bf16.gmra.mxu0 %v503
        %v1005 = vpop.f32.mrf.mxu0
        %v1006 = vadd.f32 %v559, %v1005
        %v1007 = vpop.f32.mrf.mxu0
        %v1008 = vadd.f32 %v563, %v1007
        %v1009 = vpop.f32.mrf.mxu0
        %v1010 = vadd.f32 %v559, %v1009
        %v1011 = vpop.f32.mrf.mxu0
        %v1012 = vadd.f32 %v563, %v1011
        %1013 = vmatprep.mubr.bf16.mxu0 0
        %1014 = vmatmul.mubr.bf16.gmra.mxu0 %v504
        %v1015 = vpop.f32.mrf.mxu0
        %v1016 = vadd.f32 %v559, %v1015
        %v1017 = vpop.f32.mrf.mxu0
        %v1018 = vadd.f32 %v563, %v1017
        %v1019 = vpop.f32.mrf.mxu0
        %v1020 = vadd.f32 %v559, %v1019
        %v1021 = vpop.f32.mrf.mxu0
        %v1022 = vadd.f32 %v563, %v1021
        %1023 = vmatprep.mubr.bf16.mxu0 0
        %1024 = vmatmul.mubr.bf16.gmra.mxu0 %v505
        %v1025 = vpop.f32.mrf.mxu0
        %v1026 = vadd.f32 %v559, %v1025
        %v1027 = vpop.f32.mrf.mxu0
        %v1028 = vadd.f32 %v563, %v1027
        %v1029 = vpop.f32.mrf.mxu0
        %v1030 = vadd.f32 %v559, %v1029
        %v1031 = vpop.f32.mrf.mxu0
        %v1032 = vadd.f32 %v563, %v1031
        %1033 = vmatprep.mubr.bf16.mxu0 0
        %1034 = vmatmul.mubr.bf16.gmra.mxu0 %v506
        %v1035 = vpop.f32.mrf.mxu0
        %v1036 = vadd.f32 %v559, %v1035
        %v1037 = vpop.f32.mrf.mxu0
        %v1038 = vadd.f32 %v563, %v1037
        %v1039 = vpop.f32.mrf.mxu0
        %v1040 = vadd.f32 %v559, %v1039
        %v1041 = vpop.f32.mrf.mxu0
        %v1042 = vadd.f32 %v563, %v1041
        %1043 = vmatprep.mubr.bf16.mxu0 0
        %1044 = vmatmul.mubr.bf16.gmra.mxu0 %v507
        %v1045 = vpop.f32.mrf.mxu0
        %v1046 = vadd.f32 %v559, %v1045
        %v1047 = vpop.f32.mrf.mxu0
        %v1048 = vadd.f32 %v563, %v1047
        %v1049 = vpop.f32.mrf.mxu0
        %v1050 = vadd.f32 %v559, %v1049
        %v1051 = vpop.f32.mrf.mxu0
        %v1052 = vadd.f32 %v563, %v1051
        %1053 = vmatprep.mubr.bf16.mxu0 0
        %1054 = vmatmul.mubr.bf16.gmra.mxu0 %v508
        %v1055 = vpop.f32.mrf.mxu0
        %v1056 = vadd.f32 %v559, %v1055
        %v1057 = vpop.f32.mrf.mxu0
        %v1058 = vadd.f32 %v563, %v1057
        %v1059 = vpop.f32.mrf.mxu0
        %v1060 = vadd.f32 %v559, %v1059
        %v1061 = vpop.f32.mrf.mxu0
        %v1062 = vadd.f32 %v563, %v1061
        %1063 = vmatprep.mubr.bf16.mxu0 0
        %1064 = vmatmul.mubr.bf16.gmra.mxu0 %v509
        %v1065 = vpop.f32.mrf.mxu0
        %v1066 = vadd.f32 %v559, %v1065
        %v1067 = vpop.f32.mrf.mxu0
        %v1068 = vadd.f32 %v563, %v1067
        %v1069 = vpop.f32.mrf.mxu0
        %v1070 = vadd.f32 %v559, %v1069
        %v1071 = vpop.f32.mrf.mxu0
        %v1072 = vadd.f32 %v563, %v1071
        %1073 = vmatprep.mubr.bf16.mxu0 0
        %1074 = vmatmul.mubr.bf16.gmra.mxu0 %v510
        %v1075 = vpop.f32.mrf.mxu0
        %v1076 = vadd.f32 %v559, %v1075
        %v1077 = vpop.f32.mrf.mxu0
        %v1078 = vadd.f32 %v563, %v1077
        %v1079 = vpop.f32.mrf.mxu0
        %v1080 = vadd.f32 %v559, %v1079
        %v1081 = vpop.f32.mrf.mxu0
        %v1082 = vadd.f32 %v563, %v1081
        %1083 = vmatprep.mubr.bf16.mxu0 0
        %1084 = vmatmul.mubr.bf16.gmra.mxu0 %v511
        %v1085 = vpop.f32.mrf.mxu0
        %v1086 = vadd.f32 %v559, %v1085
        %v1087 = vpop.f32.mrf.mxu0
        %v1088 = vadd.f32 %v563, %v1087
        %v1089 = vpop.f32.mrf.mxu0
        %v1090 = vadd.f32 %v559, %v1089
        %v1091 = vpop.f32.mrf.mxu0
        %v1092 = vadd.f32 %v563, %v1091
        %1093 = vmatprep.mubr.bf16.mxu0 0
        %1094 = vmatmul.mubr.bf16.gmra.mxu0 %v512
        %v1095 = vpop.f32.mrf.mxu0
        %v1096 = vadd.f32 %v559, %v1095
        %v1097 = vpop.f32.mrf.mxu0
        %v1098 = vadd.f32 %v563, %v1097
        %v1099 = vpop.f32.mrf.mxu0
        %v1100 = vadd.f32 %v559, %v1099
        %v1101 = vpop.f32.mrf.mxu0
        %v1102 = vadd.f32 %v563, %v1101
        %1103 = vmatprep.mubr.bf16.mxu0 0
        %1104 = vmatmul.mubr.bf16.gmra.mxu0 %v513
        %v1105 = vpop.f32.mrf.mxu0
        %v1106 = vadd.f32 %v559, %v1105
        %v1107 = vpop.f32.mrf.mxu0
        %v1108 = vadd.f32 %v563, %v1107
        %v1109 = vpop.f32.mrf.mxu0
        %v1110 = vadd.f32 %v559, %v1109
        %v1111 = vpop.f32.mrf.mxu0
        %v1112 = vadd.f32 %v563, %v1111
        %1113 = vdwg.mxu0
        %v1114 = vmax.f32 %v763, 0.0
        %v1115 = vmax.f32 %v765, 0.0
        %v1116 = vmax.f32 %v956, 0.0
        %v1117 = vmax.f32 %v958, 0.0
        %v1118 = vmax.f32 %v767, 0.0
        %v1119 = vmax.f32 %v769, 0.0
        %v1120 = vmax.f32 %v960, 0.0
        %v1121 = vmax.f32 %v962, 0.0
        %v1122 = vmax.f32 %v773, 0.0
        %v1123 = vmax.f32 %v775, 0.0
        %v1124 = vmax.f32 %v966, 0.0
        %v1125 = vmax.f32 %v968, 0.0
        %v1126 = vmax.f32 %v777, 0.0
        %v1127 = vmax.f32 %v779, 0.0
        %v1128 = vmax.f32 %v970, 0.0
        %v1129 = vmax.f32 %v972, 0.0
        %v1130 = vmax.f32 %v783, 0.0
        %v1131 = vmax.f32 %v785, 0.0
        %v1132 = vmax.f32 %v976, 0.0
        %v1133 = vmax.f32 %v978, 0.0
        %v1134 = vmax.f32 %v787, 0.0
        %v1135 = vmax.f32 %v789, 0.0
        %v1136 = vmax.f32 %v980, 0.0
        %v1137 = vmax.f32 %v982, 0.0
        %v1138 = vmax.f32 %v793, 0.0
        %v1139 = vmax.f32 %v795, 0.0
        %v1140 = vmax.f32 %v986, 0.0
        %v1141 = vmax.f32 %v988, 0.0
        %v1142 = vmax.f32 %v797, 0.0
        %v1143 = vmax.f32 %v799, 0.0
        %v1144 = vmax.f32 %v990, 0.0
        %v1145 = vmax.f32 %v992, 0.0
        %v1146 = vmax.f32 %v803, 0.0
        %v1147 = vmax.f32 %v805, 0.0
        %v1148 = vmax.f32 %v996, 0.0
        %v1149 = vmax.f32 %v998, 0.0
        %v1150 = vmax.f32 %v807, 0.0
        %v1151 = vmax.f32 %v809, 0.0
        %v1152 = vmax.f32 %v1000, 0.0
        %v1153 = vmax.f32 %v1002, 0.0
        %v1154 = vmax.f32 %v813, 0.0
        %v1155 = vmax.f32 %v815, 0.0
        %v1156 = vmax.f32 %v1006, 0.0
        %v1157 = vmax.f32 %v1008, 0.0
        %v1158 = vmax.f32 %v817, 0.0
        %v1159 = vmax.f32 %v819, 0.0
        %v1160 = vmax.f32 %v1010, 0.0
        %v1161 = vmax.f32 %v1012, 0.0
        %v1162 = vmax.f32 %v823, 0.0
        %v1163 = vmax.f32 %v825, 0.0
        %v1164 = vmax.f32 %v1016, 0.0
        %v1165 = vmax.f32 %v1018, 0.0
        %v1166 = vmax.f32 %v827, 0.0
        %v1167 = vmax.f32 %v829, 0.0
        %v1168 = vmax.f32 %v1020, 0.0
        %v1169 = vmax.f32 %v1022, 0.0
        %v1170 = vmax.f32 %v833, 0.0
        %v1171 = vmax.f32 %v835, 0.0
        %v1172 = vmax.f32 %v1026, 0.0
        %v1173 = vmax.f32 %v1028, 0.0
        %v1174 = vmax.f32 %v837, 0.0
        %v1175 = vmax.f32 %v839, 0.0
        %v1176 = vmax.f32 %v1030, 0.0
        %v1177 = vmax.f32 %v1032, 0.0
        %v1178 = vmax.f32 %v843, 0.0
        %v1179 = vmax.f32 %v845, 0.0
        %v1180 = vmax.f32 %v1036, 0.0
        %v1181 = vmax.f32 %v1038, 0.0
        %v1182 = vmax.f32 %v847, 0.0
        %v1183 = vmax.f32 %v849, 0.0
        %v1184 = vmax.f32 %v1040, 0.0
        %v1185 = vmax.f32 %v1042, 0.0
        %v1186 = vmax.f32 %v853, 0.0
        %v1187 = vmax.f32 %v855, 0.0
        %v1188 = vmax.f32 %v1046, 0.0
        %v1189 = vmax.f32 %v1048, 0.0
        %v1190 = vmax.f32 %v857, 0.0
        %v1191 = vmax.f32 %v859, 0.0
        %v1192 = vmax.f32 %v1050, 0.0
        %v1193 = vmax.f32 %v1052, 0.0
        %v1194 = vmax.f32 %v863, 0.0
        %v1195 = vmax.f32 %v865, 0.0
        %v1196 = vmax.f32 %v1056, 0.0
        %v1197 = vmax.f32 %v1058, 0.0
        %v1198 = vmax.f32 %v867, 0.0
        %v1199 = vmax.f32 %v869, 0.0
        %v1200 = vmax.f32 %v1060, 0.0
        %v1201 = vmax.f32 %v1062, 0.0
        %v1202 = vmax.f32 %v873, 0.0
        %v1203 = vmax.f32 %v875, 0.0
        %v1204 = vmax.f32 %v1066, 0.0
        %v1205 = vmax.f32 %v1068, 0.0
        %v1206 = vmax.f32 %v877, 0.0
        %v1207 = vmax.f32 %v879, 0.0
        %v1208 = vmax.f32 %v1070, 0.0
        %v1209 = vmax.f32 %v1072, 0.0
        %v1210 = vmax.f32 %v883, 0.0
        %v1211 = vmax.f32 %v885, 0.0
        %v1212 = vmax.f32 %v1076, 0.0
        %v1213 = vmax.f32 %v1078, 0.0
        %v1214 = vmax.f32 %v887, 0.0
        %v1215 = vmax.f32 %v889, 0.0
        %v1216 = vmax.f32 %v1080, 0.0
        %v1217 = vmax.f32 %v1082, 0.0
        %v1218 = vmax.f32 %v893, 0.0
        %v1219 = vmax.f32 %v895, 0.0
        %v1220 = vmax.f32 %v1086, 0.0
        %v1221 = vmax.f32 %v1088, 0.0
        %v1222 = vmax.f32 %v897, 0.0
        %v1223 = vmax.f32 %v899, 0.0
        %v1224 = vmax.f32 %v1090, 0.0
        %v1225 = vmax.f32 %v1092, 0.0
        %v1226 = vmax.f32 %v903, 0.0
        %v1227 = vmax.f32 %v905, 0.0
        %v1228 = vmax.f32 %v1096, 0.0
        %v1229 = vmax.f32 %v1098, 0.0
        %v1230 = vmax.f32 %v907, 0.0
        %v1231 = vmax.f32 %v909, 0.0
        %v1232 = vmax.f32 %v1100, 0.0
        %v1233 = vmax.f32 %v1102, 0.0
        %v1234 = vmax.f32 %v913, 0.0
        %v1235 = vmax.f32 %v915, 0.0
        %v1236 = vmax.f32 %v1106, 0.0
        %v1237 = vmax.f32 %v1108, 0.0
        %v1238 = vmax.f32 %v917, 0.0
        %v1239 = vmax.f32 %v919, 0.0
        %v1240 = vmax.f32 %v1110, 0.0
        %v1241 = vmax.f32 %v1112, 0.0
        %v1242 = vld [vmem:[#allocation2] sm:$0xff]
        %v1243 = vld [vmem:[#allocation2 + $0x8] sm:$0xff]
        %v1244 = vld [vmem:[#allocation2 + $0x10] sm:$0xff]
        %v1245 = vld [vmem:[#allocation2 + $0x18] sm:$0xff]
        %v1246 = vld [vmem:[#allocation2 + $0x20] sm:$0xff]
        %v1247 = vld [vmem:[#allocation2 + $0x28] sm:$0xff]
        %v1248 = vld [vmem:[#allocation2 + $0x30] sm:$0xff]
        %v1249 = vld [vmem:[#allocation2 + $0x38] sm:$0xff]
        %v1250 = vld [vmem:[#allocation2 + $0x40] sm:$0xff]
        %v1251 = vld [vmem:[#allocation2 + $0x48] sm:$0xff]
        %v1252 = vld [vmem:[#allocation2 + $0x50] sm:$0xff]
        %v1253 = vld [vmem:[#allocation2 + $0x58] sm:$0xff]
        %v1254 = vld [vmem:[#allocation2 + $0x60] sm:$0xff]
        %v1255 = vld [vmem:[#allocation2 + $0x68] sm:$0xff]
        %v1256 = vld [vmem:[#allocation2 + $0x70] sm:$0xff]
        %v1257 = vld [vmem:[#allocation2 + $0x78] sm:$0xff]
        %v1258 = vld [vmem:[#allocation2 + $0x80] sm:$0xff]
        %v1259 = vld [vmem:[#allocation2 + $0x88] sm:$0xff]
        %v1260 = vld [vmem:[#allocation2 + $0x90] sm:$0xff]
        %v1261 = vld [vmem:[#allocation2 + $0x98] sm:$0xff]
        %v1262 = vld [vmem:[#allocation2 + $0xa0] sm:$0xff]
        %v1263 = vld [vmem:[#allocation2 + $0xa8] sm:$0xff]
        %v1264 = vld [vmem:[#allocation2 + $0xb0] sm:$0xff]
        %v1265 = vld [vmem:[#allocation2 + $0xb8] sm:$0xff]
        %v1266 = vld [vmem:[#allocation2 + $0xc0] sm:$0xff]
        %v1267 = vld [vmem:[#allocation2 + $0xc8] sm:$0xff]
        %v1268 = vld [vmem:[#allocation2 + $0xd0] sm:$0xff]
        %v1269 = vld [vmem:[#allocation2 + $0xd8] sm:$0xff]
        %v1270 = vld [vmem:[#allocation2 + $0xe0] sm:$0xff]
        %v1271 = vld [vmem:[#allocation2 + $0xe8] sm:$0xff]
        %v1272 = vld [vmem:[#allocation2 + $0xf0] sm:$0xff]
        %v1273 = vld [vmem:[#allocation2 + $0xf8] sm:$0xff]
        %v1274 = vpack.c.bf16 %v1118, %v1114
        %v1275 = vpack.c.bf16 %v1119, %v1115
        %v1276 = vpack.c.bf16 %v1120, %v1116
        %v1277 = vpack.c.bf16 %v1121, %v1117
        %v1278 = vpack.c.bf16 %v1126, %v1122
        %v1279 = vpack.c.bf16 %v1127, %v1123
        %v1280 = vpack.c.bf16 %v1128, %v1124
        %v1281 = vpack.c.bf16 %v1129, %v1125
        %v1282 = vpack.c.bf16 %v1134, %v1130
        %v1283 = vpack.c.bf16 %v1135, %v1131
        %v1284 = vpack.c.bf16 %v1136, %v1132
        %v1285 = vpack.c.bf16 %v1137, %v1133
        %v1286 = vpack.c.bf16 %v1142, %v1138
        %v1287 = vpack.c.bf16 %v1143, %v1139
        %v1288 = vpack.c.bf16 %v1144, %v1140
        %v1289 = vpack.c.bf16 %v1145, %v1141
        %v1290 = vpack.c.bf16 %v1150, %v1146
        %v1291 = vpack.c.bf16 %v1151, %v1147
        %v1292 = vpack.c.bf16 %v1152, %v1148
        %v1293 = vpack.c.bf16 %v1153, %v1149
        %v1294 = vpack.c.bf16 %v1158, %v1154
        %v1295 = vpack.c.bf16 %v1159, %v1155
        %v1296 = vpack.c.bf16 %v1160, %v1156
        %v1297 = vpack.c.bf16 %v1161, %v1157
        %v1298 = vpack.c.bf16 %v1166, %v1162
        %v1299 = vpack.c.bf16 %v1167, %v1163
        %v1300 = vpack.c.bf16 %v1168, %v1164
        %v1301 = vpack.c.bf16 %v1169, %v1165
        %v1302 = vpack.c.bf16 %v1174, %v1170
        %v1303 = vpack.c.bf16 %v1175, %v1171
        %v1304 = vpack.c.bf16 %v1176, %v1172
        %v1305 = vpack.c.bf16 %v1177, %v1173
        %v1306 = vpack.c.bf16 %v1182, %v1178
        %v1307 = vpack.c.bf16 %v1183, %v1179
        %v1308 = vpack.c.bf16 %v1184, %v1180
        %v1309 = vpack.c.bf16 %v1185, %v1181
        %v1310 = vpack.c.bf16 %v1190, %v1186
        %v1311 = vpack.c.bf16 %v1191, %v1187
        %v1312 = vpack.c.bf16 %v1192, %v1188
        %v1313 = vpack.c.bf16 %v1193, %v1189
        %v1314 = vpack.c.bf16 %v1198, %v1194
        %v1315 = vpack.c.bf16 %v1199, %v1195
        %v1316 = vpack.c.bf16 %v1200, %v1196
        %v1317 = vpack.c.bf16 %v1201, %v1197
        %v1318 = vpack.c.bf16 %v1206, %v1202
        %v1319 = vpack.c.bf16 %v1207, %v1203
        %v1320 = vpack.c.bf16 %v1208, %v1204
        %v1321 = vpack.c.bf16 %v1209, %v1205
        %v1322 = vpack.c.bf16 %v1214, %v1210
        %v1323 = vpack.c.bf16 %v1215, %v1211
        %v1324 = vpack.c.bf16 %v1216, %v1212
        %v1325 = vpack.c.bf16 %v1217, %v1213
        %v1326 = vpack.c.bf16 %v1222, %v1218
        %v1327 = vpack.c.bf16 %v1223, %v1219
        %v1328 = vpack.c.bf16 %v1224, %v1220
        %v1329 = vpack.c.bf16 %v1225, %v1221
        %v1330 = vpack.c.bf16 %v1230, %v1226
        %v1331 = vpack.c.bf16 %v1231, %v1227
        %v1332 = vpack.c.bf16 %v1232, %v1228
        %v1333 = vpack.c.bf16 %v1233, %v1229
        %v1334 = vpack.c.bf16 %v1238, %v1234
        %v1335 = vpack.c.bf16 %v1239, %v1235
        %v1336 = vpack.c.bf16 %v1240, %v1236
        %v1337 = vpack.c.bf16 %v1241, %v1237
        %v1338 = vld [vmem:[%s378] sm:$0xf]
        %v1339 = vld [vmem:[%s378 + $0x4] sm:$0xf]
        %v1340 = vld [vmem:[%s378 + $0x8] sm:$0xf]
        %v1341 = vld [vmem:[%s378 + $0xc] sm:$0xf]
        %v1342 = vld [vmem:[%s378 + $0x10] sm:$0xf]
        %v1343 = vld [vmem:[%s378 + $0x14] sm:$0xf]
        %v1344 = vld [vmem:[%s378 + $0x18] sm:$0xf]
        %v1345 = vld [vmem:[%s378 + $0x1c] sm:$0xf]
        %v1346 = vld [vmem:[%s378 + $0x20] sm:$0xf]
        %v1347 = vld [vmem:[%s378 + $0x24] sm:$0xf]
        %v1348 = vld [vmem:[%s378 + $0x28] sm:$0xf]
        %v1349 = vld [vmem:[%s378 + $0x2c] sm:$0xf]
        %v1350 = vld [vmem:[%s378 + $0x30] sm:$0xf]
        %v1351 = vld [vmem:[%s378 + $0x34] sm:$0xf]
        %v1352 = vld [vmem:[%s378 + $0x38] sm:$0xf]
        %v1353 = vld [vmem:[%s378 + $0x3c] sm:$0xf]
        %v1354 = vld [vmem:[%s378 + $0x40] sm:$0xf]
        %v1355 = vld [vmem:[%s378 + $0x44] sm:$0xf]
        %v1356 = vld [vmem:[%s378 + $0x48] sm:$0xf]
        %v1357 = vld [vmem:[%s378 + $0x4c] sm:$0xf]
        %v1358 = vld [vmem:[%s378 + $0x50] sm:$0xf]
        %v1359 = vld [vmem:[%s378 + $0x54] sm:$0xf]
        %v1360 = vld [vmem:[%s378 + $0x58] sm:$0xf]
        %v1361 = vld [vmem:[%s378 + $0x5c] sm:$0xf]
        %v1362 = vld [vmem:[%s378 + $0x60] sm:$0xf]
        %v1363 = vld [vmem:[%s378 + $0x64] sm:$0xf]
        %v1364 = vld [vmem:[%s378 + $0x68] sm:$0xf]
        %v1365 = vld [vmem:[%s378 + $0x6c] sm:$0xf]
        %v1366 = vld [vmem:[%s378 + $0x70] sm:$0xf]
        %v1367 = vld [vmem:[%s378 + $0x74] sm:$0xf]
        %v1368 = vld [vmem:[%s378 + $0x78] sm:$0xf]
        %v1369 = vld [vmem:[%s378 + $0x7c] sm:$0xf]
        %v1370 = vld [vmem:[%s378 + $0x80] sm:$0xf]
        %v1371 = vld [vmem:[%s378 + $0x84] sm:$0xf]
        %v1372 = vld [vmem:[%s378 + $0x88] sm:$0xf]
        %v1373 = vld [vmem:[%s378 + $0x8c] sm:$0xf]
        %v1374 = vld [vmem:[%s378 + $0x90] sm:$0xf]
        %v1375 = vld [vmem:[%s378 + $0x94] sm:$0xf]
        %v1376 = vld [vmem:[%s378 + $0x98] sm:$0xf]
        %v1377 = vld [vmem:[%s378 + $0x9c] sm:$0xf]
        %v1378 = vld [vmem:[%s378 + $0xa0] sm:$0xf]
        %v1379 = vld [vmem:[%s378 + $0xa4] sm:$0xf]
        %v1380 = vld [vmem:[%s378 + $0xa8] sm:$0xf]
        %v1381 = vld [vmem:[%s378 + $0xac] sm:$0xf]
        %v1382 = vld [vmem:[%s378 + $0xb0] sm:$0xf]
        %v1383 = vld [vmem:[%s378 + $0xb4] sm:$0xf]
        %v1384 = vld [vmem:[%s378 + $0xb8] sm:$0xf]
        %v1385 = vld [vmem:[%s378 + $0xbc] sm:$0xf]
        %v1386 = vld [vmem:[%s378 + $0xc0] sm:$0xf]
        %v1387 = vld [vmem:[%s378 + $0xc4] sm:$0xf]
        %v1388 = vld [vmem:[%s378 + $0xc8] sm:$0xf]
        %v1389 = vld [vmem:[%s378 + $0xcc] sm:$0xf]
        %v1390 = vld [vmem:[%s378 + $0xd0] sm:$0xf]
        %v1391 = vld [vmem:[%s378 + $0xd4] sm:$0xf]
        %v1392 = vld [vmem:[%s378 + $0xd8] sm:$0xf]
        %v1393 = vld [vmem:[%s378 + $0xdc] sm:$0xf]
        %v1394 = vld [vmem:[%s378 + $0xe0] sm:$0xf]
        %v1395 = vld [vmem:[%s378 + $0xe4] sm:$0xf]
        %v1396 = vld [vmem:[%s378 + $0xe8] sm:$0xf]
        %v1397 = vld [vmem:[%s378 + $0xec] sm:$0xf]
        %v1398 = vld [vmem:[%s378 + $0xf0] sm:$0xf]
        %v1399 = vld [vmem:[%s378 + $0xf4] sm:$0xf]
        %v1400 = vld [vmem:[%s378 + $0xf8] sm:$0xf]
        %v1401 = vld [vmem:[%s378 + $0xfc] sm:$0xf]
        %v1466 = vunpack.c.l.b16 %v1338
        %v1467 = vunpack.c.l.b16 %v1339
        %v1468 = vunpack.c.l.b16 %v1340
        %v1469 = vunpack.c.l.b16 %v1341
        %v1470 = vunpack.c.l.b16 %v1342
        %v1471 = vunpack.c.l.b16 %v1343
        %v1472 = vunpack.c.l.b16 %v1344
        %v1473 = vunpack.c.l.b16 %v1345
        %v1474 = vunpack.c.l.b16 %v1346
        %v1475 = vunpack.c.l.b16 %v1347
        %v1476 = vunpack.c.l.b16 %v1348
        %v1477 = vunpack.c.l.b16 %v1349
        %v1478 = vunpack.c.l.b16 %v1350
        %v1479 = vunpack.c.l.b16 %v1351
        %v1480 = vunpack.c.l.b16 %v1352
        %v1481 = vunpack.c.l.b16 %v1353
        %v1482 = vunpack.c.l.b16 %v1354
        %v1483 = vunpack.c.l.b16 %v1355
        %v1484 = vunpack.c.l.b16 %v1356
        %v1485 = vunpack.c.l.b16 %v1357
        %v1486 = vunpack.c.l.b16 %v1358
        %v1487 = vunpack.c.l.b16 %v1359
        %v1488 = vunpack.c.l.b16 %v1360
        %v1489 = vunpack.c.l.b16 %v1361
        %v1490 = vunpack.c.l.b16 %v1362
        %v1491 = vunpack.c.l.b16 %v1363
        %v1492 = vunpack.c.l.b16 %v1364
        %v1493 = vunpack.c.l.b16 %v1365
        %v1494 = vunpack.c.l.b16 %v1366
        %v1495 = vunpack.c.l.b16 %v1367
        %v1496 = vunpack.c.l.b16 %v1368
        %v1497 = vunpack.c.l.b16 %v1369
        %v1498 = vunpack.c.l.b16 %v1370
        %v1499 = vunpack.c.l.b16 %v1371
        %v1500 = vunpack.c.l.b16 %v1372
        %v1501 = vunpack.c.l.b16 %v1373
        %v1502 = vunpack.c.l.b16 %v1374
        %v1503 = vunpack.c.l.b16 %v1375
        %v1504 = vunpack.c.l.b16 %v1376
        %v1505 = vunpack.c.l.b16 %v1377
        %v1506 = vunpack.c.l.b16 %v1378
        %v1507 = vunpack.c.l.b16 %v1379
        %v1508 = vunpack.c.l.b16 %v1380
        %v1509 = vunpack.c.l.b16 %v1381
        %v1510 = vunpack.c.l.b16 %v1382
        %v1511 = vunpack.c.l.b16 %v1383
        %v1512 = vunpack.c.l.b16 %v1384
        %v1513 = vunpack.c.l.b16 %v1385
        %v1514 = vunpack.c.l.b16 %v1386
        %v1515 = vunpack.c.l.b16 %v1387
        %v1516 = vunpack.c.l.b16 %v1388
        %v1517 = vunpack.c.l.b16 %v1389
        %v1518 = vunpack.c.l.b16 %v1390
        %v1519 = vunpack.c.l.b16 %v1391
        %v1520 = vunpack.c.l.b16 %v1392
        %v1521 = vunpack.c.l.b16 %v1393
        %v1522 = vunpack.c.l.b16 %v1394
        %v1523 = vunpack.c.l.b16 %v1395
        %v1524 = vunpack.c.l.b16 %v1396
        %v1525 = vunpack.c.l.b16 %v1397
        %v1526 = vunpack.c.l.b16 %v1398
        %v1527 = vunpack.c.l.b16 %v1399
        %v1528 = vunpack.c.l.b16 %v1400
        %v1529 = vunpack.c.l.b16 %v1401
        %v1530 = vpack.c.b16 %v1467, %v1466
        %v1531 = vpack.c.b16 %v1469, %v1468
        %v1532 = vpack.c.b16 %v1471, %v1470
        %v1533 = vpack.c.b16 %v1473, %v1472
        %v1534 = vpack.c.b16 %v1475, %v1474
        %v1535 = vpack.c.b16 %v1477, %v1476
        %v1536 = vpack.c.b16 %v1479, %v1478
        %v1537 = vpack.c.b16 %v1481, %v1480
        %v1538 = vpack.c.b16 %v1483, %v1482
        %v1539 = vpack.c.b16 %v1485, %v1484
        %v1540 = vpack.c.b16 %v1487, %v1486
        %v1541 = vpack.c.b16 %v1489, %v1488
        %v1542 = vpack.c.b16 %v1491, %v1490
        %v1543 = vpack.c.b16 %v1493, %v1492
        %v1544 = vpack.c.b16 %v1495, %v1494
        %v1545 = vpack.c.b16 %v1497, %v1496
        %v1546 = vpack.c.b16 %v1499, %v1498
        %v1547 = vpack.c.b16 %v1501, %v1500
        %v1548 = vpack.c.b16 %v1503, %v1502
        %v1549 = vpack.c.b16 %v1505, %v1504
        %v1550 = vpack.c.b16 %v1507, %v1506
        %v1551 = vpack.c.b16 %v1509, %v1508
        %v1552 = vpack.c.b16 %v1511, %v1510
        %v1553 = vpack.c.b16 %v1513, %v1512
        %v1554 = vpack.c.b16 %v1515, %v1514
        %v1555 = vpack.c.b16 %v1517, %v1516
        %v1556 = vpack.c.b16 %v1519, %v1518
        %v1557 = vpack.c.b16 %v1521, %v1520
        %v1558 = vpack.c.b16 %v1523, %v1522
        %v1559 = vpack.c.b16 %v1525, %v1524
        %v1560 = vpack.c.b16 %v1527, %v1526
        %v1561 = vpack.c.b16 %v1529, %v1528
        %1594 = vmatprep.subr.bf16.mxu0 0
        %1595 = vmatpush1.bf16.msra.mxu0 %v1537
        %1596 = vmatprep.subr.bf16.mxu0 0
        %1597 = vmatpush1.bf16.msra.mxu0 %v1536
        %1598 = vmatprep.subr.bf16.mxu0 0
        %1599 = vmatpush1.bf16.msra.mxu0 %v1535
        %1600 = vmatprep.subr.bf16.mxu0 0
        %1601 = vmatpush1.bf16.msra.mxu0 %v1534
        %1602 = vmatprep.subr.bf16.mxu0 0
        %1603 = vmatpush1.bf16.msra.mxu0 %v1533
        %1604 = vmatprep.subr.bf16.mxu0 0
        %1605 = vmatpush1.bf16.msra.mxu0 %v1532
        %1606 = vmatprep.subr.bf16.mxu0 0
        %1607 = vmatpush1.bf16.msra.mxu0 %v1531
        %1608 = vmatprep.subr.bf16.mxu0 0
        %1609 = vmatpush1.bf16.msra.mxu0 %v1530
        %1610 = vmatprep.subr.bf16.mxu0 0
        %1611 = vmatpush2.bf16.msra.mxu0 %v1545
        %1612 = vmatprep.subr.bf16.mxu0 0
        %1613 = vmatpush2.bf16.msra.mxu0 %v1544
        %1614 = vmatprep.subr.bf16.mxu0 0
        %1615 = vmatpush2.bf16.msra.mxu0 %v1543
        %1616 = vmatprep.subr.bf16.mxu0 0
        %1617 = vmatpush2.bf16.msra.mxu0 %v1542
        %1618 = vmatprep.subr.bf16.mxu0 0
        %1619 = vmatpush2.bf16.msra.mxu0 %v1541
        %1620 = vmatprep.subr.bf16.mxu0 0
        %1621 = vmatpush2.bf16.msra.mxu0 %v1540
        %1622 = vmatprep.subr.bf16.mxu0 0
        %1623 = vmatpush2.bf16.msra.mxu0 %v1539
        %1624 = vmatprep.subr.bf16.mxu0 0
        %1625 = vmatpush2.bf16.msra.mxu0 %v1538
        %1626 = vmatprep.mubr.bf16.mxu0 %v1275
        %1627 = vmatmul.mubr.bf16.gmra.mxu0 %v1274
        %v1628 = vpop.f32.mrf.mxu0
        %v1629 = vadd.f32 0.0, %v1628
        %v1630 = vpop.f32.mrf.mxu0
        %v1631 = vpop.f32.mrf.mxu0
        %v1632 = vadd.f32 0.0, %v1631
        %v1633 = vpop.f32.mrf.mxu0
        %1634 = vmatprep.mubr.bf16.mxu0 %v1279
        %1635 = vmatmul.mubr.bf16.gmra.mxu0 %v1278
        %v1636 = vpop.f32.mrf.mxu0
        %v1637 = vadd.f32 0.0, %v1636
        %v1638 = vpop.f32.mrf.mxu0
        %v1639 = vpop.f32.mrf.mxu0
        %v1640 = vadd.f32 0.0, %v1639
        %v1641 = vpop.f32.mrf.mxu0
        %1642 = vmatprep.mubr.bf16.mxu0 %v1283
        %1643 = vmatmul.mubr.bf16.gmra.mxu0 %v1282
        %v1644 = vpop.f32.mrf.mxu0
        %v1645 = vadd.f32 0.0, %v1644
        %v1646 = vpop.f32.mrf.mxu0
        %v1647 = vpop.f32.mrf.mxu0
        %v1648 = vadd.f32 0.0, %v1647
        %v1649 = vpop.f32.mrf.mxu0
        %1650 = vmatprep.mubr.bf16.mxu0 %v1287
        %1651 = vmatmul.mubr.bf16.gmra.mxu0 %v1286
        %v1652 = vpop.f32.mrf.mxu0
        %v1653 = vadd.f32 0.0, %v1652
        %v1654 = vpop.f32.mrf.mxu0
        %v1655 = vpop.f32.mrf.mxu0
        %v1656 = vadd.f32 0.0, %v1655
        %v1657 = vpop.f32.mrf.mxu0
        %1658 = vmatprep.mubr.bf16.mxu0 %v1291
        %1659 = vmatmul.mubr.bf16.gmra.mxu0 %v1290
        %v1660 = vpop.f32.mrf.mxu0
        %v1661 = vadd.f32 0.0, %v1660
        %v1662 = vpop.f32.mrf.mxu0
        %v1663 = vpop.f32.mrf.mxu0
        %v1664 = vadd.f32 0.0, %v1663
        %v1665 = vpop.f32.mrf.mxu0
        %1666 = vmatprep.mubr.bf16.mxu0 %v1295
        %1667 = vmatmul.mubr.bf16.gmra.mxu0 %v1294
        %v1668 = vpop.f32.mrf.mxu0
        %v1669 = vadd.f32 0.0, %v1668
        %v1670 = vpop.f32.mrf.mxu0
        %v1671 = vpop.f32.mrf.mxu0
        %v1672 = vadd.f32 0.0, %v1671
        %v1673 = vpop.f32.mrf.mxu0
        %1674 = vmatprep.mubr.bf16.mxu0 %v1299
        %1675 = vmatmul.mubr.bf16.gmra.mxu0 %v1298
        %v1676 = vpop.f32.mrf.mxu0
        %v1677 = vadd.f32 0.0, %v1676
        %v1678 = vpop.f32.mrf.mxu0
        %v1679 = vpop.f32.mrf.mxu0
        %v1680 = vadd.f32 0.0, %v1679
        %v1681 = vpop.f32.mrf.mxu0
        %1682 = vmatprep.mubr.bf16.mxu0 %v1303
        %1683 = vmatmul.mubr.bf16.gmra.mxu0 %v1302
        %v1684 = vpop.f32.mrf.mxu0
        %v1685 = vadd.f32 0.0, %v1684
        %v1686 = vpop.f32.mrf.mxu0
        %v1687 = vpop.f32.mrf.mxu0
        %v1688 = vadd.f32 0.0, %v1687
        %v1689 = vpop.f32.mrf.mxu0
        %1690 = vmatprep.mubr.bf16.mxu0 %v1307
        %1691 = vmatmul.mubr.bf16.gmra.mxu0 %v1306
        %v1692 = vpop.f32.mrf.mxu0
        %v1693 = vadd.f32 0.0, %v1692
        %v1694 = vpop.f32.mrf.mxu0
        %v1695 = vpop.f32.mrf.mxu0
        %v1696 = vadd.f32 0.0, %v1695
        %v1697 = vpop.f32.mrf.mxu0
        %1698 = vmatprep.mubr.bf16.mxu0 %v1311
        %1699 = vmatmul.mubr.bf16.gmra.mxu0 %v1310
        %v1700 = vpop.f32.mrf.mxu0
        %v1701 = vadd.f32 0.0, %v1700
        %v1702 = vpop.f32.mrf.mxu0
        %v1703 = vpop.f32.mrf.mxu0
        %v1704 = vadd.f32 0.0, %v1703
        %v1705 = vpop.f32.mrf.mxu0
        %1706 = vmatprep.mubr.bf16.mxu0 %v1315
        %1707 = vmatmul.mubr.bf16.gmra.mxu0 %v1314
        %v1708 = vpop.f32.mrf.mxu0
        %v1709 = vadd.f32 0.0, %v1708
        %v1710 = vpop.f32.mrf.mxu0
        %v1711 = vpop.f32.mrf.mxu0
        %v1712 = vadd.f32 0.0, %v1711
        %v1713 = vpop.f32.mrf.mxu0
        %1714 = vmatprep.mubr.bf16.mxu0 %v1319
        %1715 = vmatmul.mubr.bf16.gmra.mxu0 %v1318
        %v1716 = vpop.f32.mrf.mxu0
        %v1717 = vadd.f32 0.0, %v1716
        %v1718 = vpop.f32.mrf.mxu0
        %v1719 = vpop.f32.mrf.mxu0
        %v1720 = vadd.f32 0.0, %v1719
        %v1721 = vpop.f32.mrf.mxu0
        %1722 = vmatprep.mubr.bf16.mxu0 %v1323
        %1723 = vmatmul.mubr.bf16.gmra.mxu0 %v1322
        %v1724 = vpop.f32.mrf.mxu0
        %v1725 = vadd.f32 0.0, %v1724
        %v1726 = vpop.f32.mrf.mxu0
        %v1727 = vpop.f32.mrf.mxu0
        %v1728 = vadd.f32 0.0, %v1727
        %v1729 = vpop.f32.mrf.mxu0
        %1730 = vmatprep.mubr.bf16.mxu0 %v1327
        %1731 = vmatmul.mubr.bf16.gmra.mxu0 %v1326
        %v1732 = vpop.f32.mrf.mxu0
        %v1733 = vadd.f32 0.0, %v1732
        %v1734 = vpop.f32.mrf.mxu0
        %v1735 = vpop.f32.mrf.mxu0
        %v1736 = vadd.f32 0.0, %v1735
        %v1737 = vpop.f32.mrf.mxu0
        %1738 = vmatprep.mubr.bf16.mxu0 %v1331
        %1739 = vmatmul.mubr.bf16.gmra.mxu0 %v1330
        %v1740 = vpop.f32.mrf.mxu0
        %v1741 = vadd.f32 0.0, %v1740
        %v1742 = vpop.f32.mrf.mxu0
        %v1743 = vpop.f32.mrf.mxu0
        %v1744 = vadd.f32 0.0, %v1743
        %v1745 = vpop.f32.mrf.mxu0
        %1746 = vmatprep.mubr.bf16.mxu0 %v1335
        %1747 = vmatmul.mubr.bf16.gmra.mxu0 %v1334
        %v1748 = vpop.f32.mrf.mxu0
        %v1749 = vadd.f32 0.0, %v1748
        %v1750 = vpop.f32.mrf.mxu0
        %v1751 = vpop.f32.mrf.mxu0
        %v1752 = vadd.f32 0.0, %v1751
        %v1753 = vpop.f32.mrf.mxu0
        %1754 = vdwg.mxu0
        %1755 = vmatprep.subr.bf16.mxu0 0
        %1756 = vmatpush1.bf16.msra.mxu0 %v1553
        %1757 = vmatprep.subr.bf16.mxu0 0
        %1758 = vmatpush1.bf16.msra.mxu0 %v1552
        %1759 = vmatprep.subr.bf16.mxu0 0
        %1760 = vmatpush1.bf16.msra.mxu0 %v1551
        %1761 = vmatprep.subr.bf16.mxu0 0
        %1762 = vmatpush1.bf16.msra.mxu0 %v1550
        %1763 = vmatprep.subr.bf16.mxu0 0
        %1764 = vmatpush1.bf16.msra.mxu0 %v1549
        %1765 = vmatprep.subr.bf16.mxu0 0
        %1766 = vmatpush1.bf16.msra.mxu0 %v1548
        %1767 = vmatprep.subr.bf16.mxu0 0
        %1768 = vmatpush1.bf16.msra.mxu0 %v1547
        %1769 = vmatprep.subr.bf16.mxu0 0
        %1770 = vmatpush1.bf16.msra.mxu0 %v1546
        %1771 = vmatprep.subr.bf16.mxu0 0
        %1772 = vmatpush2.bf16.msra.mxu0 %v1561
        %1773 = vmatprep.subr.bf16.mxu0 0
        %1774 = vmatpush2.bf16.msra.mxu0 %v1560
        %1775 = vmatprep.subr.bf16.mxu0 0
        %1776 = vmatpush2.bf16.msra.mxu0 %v1559
        %1777 = vmatprep.subr.bf16.mxu0 0
        %1778 = vmatpush2.bf16.msra.mxu0 %v1558
        %1779 = vmatprep.subr.bf16.mxu0 0
        %1780 = vmatpush2.bf16.msra.mxu0 %v1557
        %1781 = vmatprep.subr.bf16.mxu0 0
        %1782 = vmatpush2.bf16.msra.mxu0 %v1556
        %1783 = vmatprep.subr.bf16.mxu0 0
        %1784 = vmatpush2.bf16.msra.mxu0 %v1555
        %1785 = vmatprep.subr.bf16.mxu0 0
        %1786 = vmatpush2.bf16.msra.mxu0 %v1554
        %1787 = vmatprep.mubr.bf16.mxu0 %v1277
        %1788 = vmatmul.mubr.bf16.gmra.mxu0 %v1276
        %v1789 = vpop.f32.mrf.mxu0
        %v1790 = vadd.f32 %v1629, %v1789
        %v1791 = vpop.f32.mrf.mxu0
        %v1792 = vpop.f32.mrf.mxu0
        %v1793 = vadd.f32 %v1632, %v1792
        %v1794 = vpop.f32.mrf.mxu0
        %1795 = vmatprep.mubr.bf16.mxu0 %v1281
        %1796 = vmatmul.mubr.bf16.gmra.mxu0 %v1280
        %v1797 = vpop.f32.mrf.mxu0
        %v1798 = vadd.f32 %v1637, %v1797
        %v1799 = vpop.f32.mrf.mxu0
        %v1800 = vpop.f32.mrf.mxu0
        %v1801 = vadd.f32 %v1640, %v1800
        %v1802 = vpop.f32.mrf.mxu0
        %1803 = vmatprep.mubr.bf16.mxu0 %v1285
        %1804 = vmatmul.mubr.bf16.gmra.mxu0 %v1284
        %v1805 = vpop.f32.mrf.mxu0
        %v1806 = vadd.f32 %v1645, %v1805
        %v1807 = vpop.f32.mrf.mxu0
        %v1808 = vpop.f32.mrf.mxu0
        %v1809 = vadd.f32 %v1648, %v1808
        %v1810 = vpop.f32.mrf.mxu0
        %1811 = vmatprep.mubr.bf16.mxu0 %v1289
        %1812 = vmatmul.mubr.bf16.gmra.mxu0 %v1288
        %v1813 = vpop.f32.mrf.mxu0
        %v1814 = vadd.f32 %v1653, %v1813
        %v1815 = vpop.f32.mrf.mxu0
        %v1816 = vpop.f32.mrf.mxu0
        %v1817 = vadd.f32 %v1656, %v1816
        %v1818 = vpop.f32.mrf.mxu0
        %1819 = vmatprep.mubr.bf16.mxu0 %v1293
        %1820 = vmatmul.mubr.bf16.gmra.mxu0 %v1292
        %v1821 = vpop.f32.mrf.mxu0
        %v1822 = vadd.f32 %v1661, %v1821
        %v1823 = vpop.f32.mrf.mxu0
        %v1824 = vpop.f32.mrf.mxu0
        %v1825 = vadd.f32 %v1664, %v1824
        %v1826 = vpop.f32.mrf.mxu0
        %1827 = vmatprep.mubr.bf16.mxu0 %v1297
        %1828 = vmatmul.mubr.bf16.gmra.mxu0 %v1296
        %v1829 = vpop.f32.mrf.mxu0
        %v1830 = vadd.f32 %v1669, %v1829
        %v1831 = vpop.f32.mrf.mxu0
        %v1832 = vpop.f32.mrf.mxu0
        %v1833 = vadd.f32 %v1672, %v1832
        %v1834 = vpop.f32.mrf.mxu0
        %1835 = vmatprep.mubr.bf16.mxu0 %v1301
        %1836 = vmatmul.mubr.bf16.gmra.mxu0 %v1300
        %v1837 = vpop.f32.mrf.mxu0
        %v1838 = vadd.f32 %v1677, %v1837
        %v1839 = vpop.f32.mrf.mxu0
        %v1840 = vpop.f32.mrf.mxu0
        %v1841 = vadd.f32 %v1680, %v1840
        %v1842 = vpop.f32.mrf.mxu0
        %1843 = vmatprep.mubr.bf16.mxu0 %v1305
        %1844 = vmatmul.mubr.bf16.gmra.mxu0 %v1304
        %v1845 = vpop.f32.mrf.mxu0
        %v1846 = vadd.f32 %v1685, %v1845
        %v1847 = vpop.f32.mrf.mxu0
        %v1848 = vpop.f32.mrf.mxu0
        %v1849 = vadd.f32 %v1688, %v1848
        %v1850 = vpop.f32.mrf.mxu0
        %1851 = vmatprep.mubr.bf16.mxu0 %v1309
        %1852 = vmatmul.mubr.bf16.gmra.mxu0 %v1308
        %v1853 = vpop.f32.mrf.mxu0
        %v1854 = vadd.f32 %v1693, %v1853
        %v1855 = vpop.f32.mrf.mxu0
        %v1856 = vpop.f32.mrf.mxu0
        %v1857 = vadd.f32 %v1696, %v1856
        %v1858 = vpop.f32.mrf.mxu0
        %1859 = vmatprep.mubr.bf16.mxu0 %v1313
        %1860 = vmatmul.mubr.bf16.gmra.mxu0 %v1312
        %v1861 = vpop.f32.mrf.mxu0
        %v1862 = vadd.f32 %v1701, %v1861
        %v1863 = vpop.f32.mrf.mxu0
        %v1864 = vpop.f32.mrf.mxu0
        %v1865 = vadd.f32 %v1704, %v1864
        %v1866 = vpop.f32.mrf.mxu0
        %1867 = vmatprep.mubr.bf16.mxu0 %v1317
        %1868 = vmatmul.mubr.bf16.gmra.mxu0 %v1316
        %v1869 = vpop.f32.mrf.mxu0
        %v1870 = vadd.f32 %v1709, %v1869
        %v1871 = vpop.f32.mrf.mxu0
        %v1872 = vpop.f32.mrf.mxu0
        %v1873 = vadd.f32 %v1712, %v1872
        %v1874 = vpop.f32.mrf.mxu0
        %1875 = vmatprep.mubr.bf16.mxu0 %v1321
        %1876 = vmatmul.mubr.bf16.gmra.mxu0 %v1320
        %v1877 = vpop.f32.mrf.mxu0
        %v1878 = vadd.f32 %v1717, %v1877
        %v1879 = vpop.f32.mrf.mxu0
        %v1880 = vpop.f32.mrf.mxu0
        %v1881 = vadd.f32 %v1720, %v1880
        %v1882 = vpop.f32.mrf.mxu0
        %1883 = vmatprep.mubr.bf16.mxu0 %v1325
        %1884 = vmatmul.mubr.bf16.gmra.mxu0 %v1324
        %v1885 = vpop.f32.mrf.mxu0
        %v1886 = vadd.f32 %v1725, %v1885
        %v1887 = vpop.f32.mrf.mxu0
        %v1888 = vpop.f32.mrf.mxu0
        %v1889 = vadd.f32 %v1728, %v1888
        %v1890 = vpop.f32.mrf.mxu0
        %1891 = vmatprep.mubr.bf16.mxu0 %v1329
        %1892 = vmatmul.mubr.bf16.gmra.mxu0 %v1328
        %v1893 = vpop.f32.mrf.mxu0
        %v1894 = vadd.f32 %v1733, %v1893
        %v1895 = vpop.f32.mrf.mxu0
        %v1896 = vpop.f32.mrf.mxu0
        %v1897 = vadd.f32 %v1736, %v1896
        %v1898 = vpop.f32.mrf.mxu0
        %1899 = vmatprep.mubr.bf16.mxu0 %v1333
        %1900 = vmatmul.mubr.bf16.gmra.mxu0 %v1332
        %v1901 = vpop.f32.mrf.mxu0
        %v1902 = vadd.f32 %v1741, %v1901
        %v1903 = vpop.f32.mrf.mxu0
        %v1904 = vpop.f32.mrf.mxu0
        %v1905 = vadd.f32 %v1744, %v1904
        %v1906 = vpop.f32.mrf.mxu0
        %1907 = vmatprep.mubr.bf16.mxu0 %v1337
        %1908 = vmatmul.mubr.bf16.gmra.mxu0 %v1336
        %v1909 = vpop.f32.mrf.mxu0
        %v1910 = vadd.f32 %v1749, %v1909
        %v1911 = vpop.f32.mrf.mxu0
        %v1912 = vpop.f32.mrf.mxu0
        %v1913 = vadd.f32 %v1752, %v1912
        %v1914 = vpop.f32.mrf.mxu0
        %1915 = vdwg.mxu0
        %v1916 = vadd.f32 %v1242, %v1790
        %v1917 = vadd.f32 %v1243, %v1793
        %v1918 = vadd.f32 %v1244, %v1798
        %v1919 = vadd.f32 %v1245, %v1801
        %v1920 = vadd.f32 %v1246, %v1806
        %v1921 = vadd.f32 %v1247, %v1809
        %v1922 = vadd.f32 %v1248, %v1814
        %v1923 = vadd.f32 %v1249, %v1817
        %v1924 = vadd.f32 %v1250, %v1822
        %v1925 = vadd.f32 %v1251, %v1825
        %v1926 = vadd.f32 %v1252, %v1830
        %v1927 = vadd.f32 %v1253, %v1833
        %v1928 = vadd.f32 %v1254, %v1838
        %v1929 = vadd.f32 %v1255, %v1841
        %v1930 = vadd.f32 %v1256, %v1846
        %v1931 = vadd.f32 %v1257, %v1849
        %v1932 = vadd.f32 %v1258, %v1854
        %v1933 = vadd.f32 %v1259, %v1857
        %v1934 = vadd.f32 %v1260, %v1862
        %v1935 = vadd.f32 %v1261, %v1865
        %v1936 = vadd.f32 %v1262, %v1870
        %v1937 = vadd.f32 %v1263, %v1873
        %v1938 = vadd.f32 %v1264, %v1878
        %v1939 = vadd.f32 %v1265, %v1881
        %v1940 = vadd.f32 %v1266, %v1886
        %v1941 = vadd.f32 %v1267, %v1889
        %v1942 = vadd.f32 %v1268, %v1894
        %v1943 = vadd.f32 %v1269, %v1897
        %v1944 = vadd.f32 %v1270, %v1902
        %v1945 = vadd.f32 %v1271, %v1905
        %v1946 = vadd.f32 %v1272, %v1910
        %v1947 = vadd.f32 %v1273, %v1913
        %1948 = vst [vmem:[#allocation2] sm:$0xff] %v1916
        %1949 = vst [vmem:[#allocation2 + $0x8] sm:$0xff] %v1917
        %1950 = vst [vmem:[#allocation2 + $0x10] sm:$0xff] %v1918
        %1951 = vst [vmem:[#allocation2 + $0x18] sm:$0xff] %v1919
        %1952 = vst [vmem:[#allocation2 + $0x20] sm:$0xff] %v1920
        %1953 = vst [vmem:[#allocation2 + $0x28] sm:$0xff] %v1921
        %1954 = vst [vmem:[#allocation2 + $0x30] sm:$0xff] %v1922
        %1955 = vst [vmem:[#allocation2 + $0x38] sm:$0xff] %v1923
        %1956 = vst [vmem:[#allocation2 + $0x40] sm:$0xff] %v1924
        %1957 = vst [vmem:[#allocation2 + $0x48] sm:$0xff] %v1925
        %1958 = vst [vmem:[#allocation2 + $0x50] sm:$0xff] %v1926
        %1959 = vst [vmem:[#allocation2 + $0x58] sm:$0xff] %v1927
        %1960 = vst [vmem:[#allocation2 + $0x60] sm:$0xff] %v1928
        %1961 = vst [vmem:[#allocation2 + $0x68] sm:$0xff] %v1929
        %1962 = vst [vmem:[#allocation2 + $0x70] sm:$0xff] %v1930
        %1963 = vst [vmem:[#allocation2 + $0x78] sm:$0xff] %v1931
        %1964 = vst [vmem:[#allocation2 + $0x80] sm:$0xff] %v1932
        %1965 = vst [vmem:[#allocation2 + $0x88] sm:$0xff] %v1933
        %1966 = vst [vmem:[#allocation2 + $0x90] sm:$0xff] %v1934
        %1967 = vst [vmem:[#allocation2 + $0x98] sm:$0xff] %v1935
        %1968 = vst [vmem:[#allocation2 + $0xa0] sm:$0xff] %v1936
        %1969 = vst [vmem:[#allocation2 + $0xa8] sm:$0xff] %v1937
        %1970 = vst [vmem:[#allocation2 + $0xb0] sm:$0xff] %v1938
        %1971 = vst [vmem:[#allocation2 + $0xb8] sm:$0xff] %v1939
        %1972 = vst [vmem:[#allocation2 + $0xc0] sm:$0xff] %v1940
        %1973 = vst [vmem:[#allocation2 + $0xc8] sm:$0xff] %v1941
        %1974 = vst [vmem:[#allocation2 + $0xd0] sm:$0xff] %v1942
        %1975 = vst [vmem:[#allocation2 + $0xd8] sm:$0xff] %v1943
        %1976 = vst [vmem:[#allocation2 + $0xe0] sm:$0xff] %v1944
        %1977 = vst [vmem:[#allocation2 + $0xe8] sm:$0xff] %v1945
        %1978 = vst [vmem:[#allocation2 + $0xf0] sm:$0xff] %v1946
        %1979 = vst [vmem:[#allocation2 + $0xf8] sm:$0xff] %v1947
        %p1980 = scmp.eq.s32.totalorder %s35, 1
        // Predicated region
        $region69: #{tpu_custom_call.1} parent=47 // pred_check
          %p1981 = pneg %p1980
        $region70: #{tpu_custom_call.1} parent=47 // pred_check_branch
          %1983 = sbr.rel (%p1981) target = $region72
        $region71: #{tpu_custom_call.1} parent=47 // pred_region
          %v1984 = vld [vmem:[#allocation2] sm:$0xff]
          %v1985 = vld [vmem:[#allocation2 + $0x8] sm:$0xff]
          %v1986 = vld [vmem:[#allocation2 + $0x10] sm:$0xff]
          %v1987 = vld [vmem:[#allocation2 + $0x18] sm:$0xff]
          %v1988 = vld [vmem:[#allocation2 + $0x20] sm:$0xff]
          %v1989 = vld [vmem:[#allocation2 + $0x28] sm:$0xff]
          %v1990 = vld [vmem:[#allocation2 + $0x30] sm:$0xff]
          %v1991 = vld [vmem:[#allocation2 + $0x38] sm:$0xff]
          %v1992 = vld [vmem:[#allocation2 + $0x40] sm:$0xff]
          %v1993 = vld [vmem:[#allocation2 + $0x48] sm:$0xff]
          %v1994 = vld [vmem:[#allocation2 + $0x50] sm:$0xff]
          %v1995 = vld [vmem:[#allocation2 + $0x58] sm:$0xff]
          %v1996 = vld [vmem:[#allocation2 + $0x60] sm:$0xff]
          %v1997 = vld [vmem:[#allocation2 + $0x68] sm:$0xff]
          %v1998 = vld [vmem:[#allocation2 + $0x70] sm:$0xff]
          %v1999 = vld [vmem:[#allocation2 + $0x78] sm:$0xff]
          %v2000 = vld [vmem:[#allocation2 + $0x80] sm:$0xff]
          %v2001 = vld [vmem:[#allocation2 + $0x88] sm:$0xff]
          %v2002 = vld [vmem:[#allocation2 + $0x90] sm:$0xff]
          %v2003 = vld [vmem:[#allocation2 + $0x98] sm:$0xff]
          %v2004 = vld [vmem:[#allocation2 + $0xa0] sm:$0xff]
          %v2005 = vld [vmem:[#allocation2 + $0xa8] sm:$0xff]
          %v2006 = vld [vmem:[#allocation2 + $0xb0] sm:$0xff]
          %v2007 = vld [vmem:[#allocation2 + $0xb8] sm:$0xff]
          %v2008 = vld [vmem:[#allocation2 + $0xc0] sm:$0xff]
          %v2009 = vld [vmem:[#allocation2 + $0xc8] sm:$0xff]
          %v2010 = vld [vmem:[#allocation2 + $0xd0] sm:$0xff]
          %v2011 = vld [vmem:[#allocation2 + $0xd8] sm:$0xff]
          %v2012 = vld [vmem:[#allocation2 + $0xe0] sm:$0xff]
          %v2013 = vld [vmem:[#allocation2 + $0xe8] sm:$0xff]
          %v2014 = vld [vmem:[#allocation2 + $0xf0] sm:$0xff]
          %v2015 = vld [vmem:[#allocation2 + $0xf8] sm:$0xff]
          %v2016 = vld [vmem:[%s4] sm:$0x1]
          %v2018 = vlaneseq
          %v2019 = vshrl.u32 %v2018, 7
          %v2020 = vsub.s32 0, %v2019
          %v2021 = vrot.slane %v2016, %v2020
          %v2023 = vadd.f32 %v1984, %v2021
          %v2024 = vadd.f32 %v1985, %v2021
          %v2025 = vadd.f32 %v1986, %v2021
          %v2026 = vadd.f32 %v1987, %v2021
          %v2027 = vadd.f32 %v1988, %v2021
          %v2028 = vadd.f32 %v1989, %v2021
          %v2029 = vadd.f32 %v1990, %v2021
          %v2030 = vadd.f32 %v1991, %v2021
          %v2031 = vadd.f32 %v1992, %v2021
          %v2032 = vadd.f32 %v1993, %v2021
          %v2033 = vadd.f32 %v1994, %v2021
          %v2034 = vadd.f32 %v1995, %v2021
          %v2035 = vadd.f32 %v1996, %v2021
          %v2036 = vadd.f32 %v1997, %v2021
          %v2037 = vadd.f32 %v1998, %v2021
          %v2038 = vadd.f32 %v1999, %v2021
          %v2039 = vadd.f32 %v2000, %v2021
          %v2040 = vadd.f32 %v2001, %v2021
          %v2041 = vadd.f32 %v2002, %v2021
          %v2042 = vadd.f32 %v2003, %v2021
          %v2043 = vadd.f32 %v2004, %v2021
          %v2044 = vadd.f32 %v2005, %v2021
          %v2045 = vadd.f32 %v2006, %v2021
          %v2046 = vadd.f32 %v2007, %v2021
          %v2047 = vadd.f32 %v2008, %v2021
          %v2048 = vadd.f32 %v2009, %v2021
          %v2049 = vadd.f32 %v2010, %v2021
          %v2050 = vadd.f32 %v2011, %v2021
          %v2051 = vadd.f32 %v2012, %v2021
          %v2052 = vadd.f32 %v2013, %v2021
          %v2053 = vadd.f32 %v2014, %v2021
          %v2054 = vadd.f32 %v2015, %v2021
          %v2055 = vadd.f32 %v466, %v2023
          %v2056 = vadd.f32 %v467, %v2024
          %v2057 = vadd.f32 %v468, %v2025
          %v2058 = vadd.f32 %v469, %v2026
          %v2059 = vadd.f32 %v470, %v2027
          %v2060 = vadd.f32 %v471, %v2028
          %v2061 = vadd.f32 %v472, %v2029
          %v2062 = vadd.f32 %v473, %v2030
          %v2063 = vadd.f32 %v474, %v2031
          %v2064 = vadd.f32 %v475, %v2032
          %v2065 = vadd.f32 %v476, %v2033
          %v2066 = vadd.f32 %v477, %v2034
          %v2067 = vadd.f32 %v478, %v2035
          %v2068 = vadd.f32 %v479, %v2036
          %v2069 = vadd.f32 %v480, %v2037
          %v2070 = vadd.f32 %v481, %v2038
          %v2071 = vadd.f32 %v482, %v2039
          %v2072 = vadd.f32 %v483, %v2040
          %v2073 = vadd.f32 %v484, %v2041
          %v2074 = vadd.f32 %v485, %v2042
          %v2075 = vadd.f32 %v486, %v2043
          %v2076 = vadd.f32 %v487, %v2044
          %v2077 = vadd.f32 %v488, %v2045
          %v2078 = vadd.f32 %v489, %v2046
          %v2079 = vadd.f32 %v490, %v2047
          %v2080 = vadd.f32 %v491, %v2048
          %v2081 = vadd.f32 %v492, %v2049
          %v2082 = vadd.f32 %v493, %v2050
          %v2083 = vadd.f32 %v494, %v2051
          %v2084 = vadd.f32 %v495, %v2052
          %v2085 = vadd.f32 %v496, %v2053
          %v2086 = vadd.f32 %v497, %v2054
          %2087 = vadd.xlane.f32.xlu0 %v2055
          %v2088 = vpop.xlane.xlu0 %2087
          %2089 = vadd.xlane.f32.xlu0 %v2056
          %v2090 = vpop.xlane.xlu0 %2089
          %2091 = vadd.xlane.f32.xlu0 %v2057
          %v2092 = vpop.xlane.xlu0 %2091
          %2093 = vadd.xlane.f32.xlu0 %v2058
          %v2094 = vpop.xlane.xlu0 %2093
          %2095 = vadd.xlane.f32.xlu0 %v2059
          %v2096 = vpop.xlane.xlu0 %2095
          %2097 = vadd.xlane.f32.xlu0 %v2060
          %v2098 = vpop.xlane.xlu0 %2097
          %2099 = vadd.xlane.f32.xlu0 %v2061
          %v2100 = vpop.xlane.xlu0 %2099
          %2101 = vadd.xlane.f32.xlu0 %v2062
          %v2102 = vpop.xlane.xlu0 %2101
          %2103 = vadd.xlane.f32.xlu0 %v2063
          %v2104 = vpop.xlane.xlu0 %2103
          %2105 = vadd.xlane.f32.xlu0 %v2064
          %v2106 = vpop.xlane.xlu0 %2105
          %2107 = vadd.xlane.f32.xlu0 %v2065
          %v2108 = vpop.xlane.xlu0 %2107
          %2109 = vadd.xlane.f32.xlu0 %v2066
          %v2110 = vpop.xlane.xlu0 %2109
          %2111 = vadd.xlane.f32.xlu0 %v2067
          %v2112 = vpop.xlane.xlu0 %2111
          %2113 = vadd.xlane.f32.xlu0 %v2068
          %v2114 = vpop.xlane.xlu0 %2113
          %2115 = vadd.xlane.f32.xlu0 %v2069
          %v2116 = vpop.xlane.xlu0 %2115
          %2117 = vadd.xlane.f32.xlu0 %v2070
          %v2118 = vpop.xlane.xlu0 %2117
          %2119 = vadd.xlane.f32.xlu0 %v2071
          %v2120 = vpop.xlane.xlu0 %2119
          %2121 = vadd.xlane.f32.xlu0 %v2072
          %v2122 = vpop.xlane.xlu0 %2121
          %2123 = vadd.xlane.f32.xlu0 %v2073
          %v2124 = vpop.xlane.xlu0 %2123
          %2125 = vadd.xlane.f32.xlu0 %v2074
          %v2126 = vpop.xlane.xlu0 %2125
          %2127 = vadd.xlane.f32.xlu0 %v2075
          %v2128 = vpop.xlane.xlu0 %2127
          %2129 = vadd.xlane.f32.xlu0 %v2076
          %v2130 = vpop.xlane.xlu0 %2129
          %2131 = vadd.xlane.f32.xlu0 %v2077
          %v2132 = vpop.xlane.xlu0 %2131
          %2133 = vadd.xlane.f32.xlu0 %v2078
          %v2134 = vpop.xlane.xlu0 %2133
          %2135 = vadd.xlane.f32.xlu0 %v2079
          %v2136 = vpop.xlane.xlu0 %2135
          %2137 = vadd.xlane.f32.xlu0 %v2080
          %v2138 = vpop.xlane.xlu0 %2137
          %2139 = vadd.xlane.f32.xlu0 %v2081
          %v2140 = vpop.xlane.xlu0 %2139
          %2141 = vadd.xlane.f32.xlu0 %v2082
          %v2142 = vpop.xlane.xlu0 %2141
          %2143 = vadd.xlane.f32.xlu0 %v2083
          %v2144 = vpop.xlane.xlu0 %2143
          %2145 = vadd.xlane.f32.xlu0 %v2084
          %v2146 = vpop.xlane.xlu0 %2145
          %2147 = vadd.xlane.f32.xlu0 %v2085
          %v2148 = vpop.xlane.xlu0 %2147
          %2149 = vadd.xlane.f32.xlu0 %v2086
          %v2150 = vpop.xlane.xlu0 %2149
          %v2151 = vmul.f32 %v2088, 0.0078125
          %v2152 = vmul.f32 %v2090, 0.0078125
          %v2153 = vmul.f32 %v2092, 0.0078125
          %v2154 = vmul.f32 %v2094, 0.0078125
          %v2155 = vmul.f32 %v2096, 0.0078125
          %v2156 = vmul.f32 %v2098, 0.0078125
          %v2157 = vmul.f32 %v2100, 0.0078125
          %v2158 = vmul.f32 %v2102, 0.0078125
          %v2159 = vmul.f32 %v2104, 0.0078125
          %v2160 = vmul.f32 %v2106, 0.0078125
          %v2161 = vmul.f32 %v2108, 0.0078125
          %v2162 = vmul.f32 %v2110, 0.0078125
          %v2163 = vmul.f32 %v2112, 0.0078125
          %v2164 = vmul.f32 %v2114, 0.0078125
          %v2165 = vmul.f32 %v2116, 0.0078125
          %v2166 = vmul.f32 %v2118, 0.0078125
          %v2167 = vmul.f32 %v2120, 0.0078125
          %v2168 = vmul.f32 %v2122, 0.0078125
          %v2169 = vmul.f32 %v2124, 0.0078125
          %v2170 = vmul.f32 %v2126, 0.0078125
          %v2171 = vmul.f32 %v2128, 0.0078125
          %v2172 = vmul.f32 %v2130, 0.0078125
          %v2173 = vmul.f32 %v2132, 0.0078125
          %v2174 = vmul.f32 %v2134, 0.0078125
          %v2175 = vmul.f32 %v2136, 0.0078125
          %v2176 = vmul.f32 %v2138, 0.0078125
          %v2177 = vmul.f32 %v2140, 0.0078125
          %v2178 = vmul.f32 %v2142, 0.0078125
          %v2179 = vmul.f32 %v2144, 0.0078125
          %v2180 = vmul.f32 %v2146, 0.0078125
          %v2181 = vmul.f32 %v2148, 0.0078125
          %v2182 = vmul.f32 %v2150, 0.0078125
          %v2183 = vmul.f32 %v2055, %v2055
          %v2184 = vmul.f32 %v2056, %v2056
          %v2185 = vmul.f32 %v2057, %v2057
          %v2186 = vmul.f32 %v2058, %v2058
          %v2187 = vmul.f32 %v2059, %v2059
          %v2188 = vmul.f32 %v2060, %v2060
          %v2189 = vmul.f32 %v2061, %v2061
          %v2190 = vmul.f32 %v2062, %v2062
          %v2191 = vmul.f32 %v2063, %v2063
          %v2192 = vmul.f32 %v2064, %v2064
          %v2193 = vmul.f32 %v2065, %v2065
          %v2194 = vmul.f32 %v2066, %v2066
          %v2195 = vmul.f32 %v2067, %v2067
          %v2196 = vmul.f32 %v2068, %v2068
          %v2197 = vmul.f32 %v2069, %v2069
          %v2198 = vmul.f32 %v2070, %v2070
          %v2199 = vmul.f32 %v2071, %v2071
          %v2200 = vmul.f32 %v2072, %v2072
          %v2201 = vmul.f32 %v2073, %v2073
          %v2202 = vmul.f32 %v2074, %v2074
          %v2203 = vmul.f32 %v2075, %v2075
          %v2204 = vmul.f32 %v2076, %v2076
          %v2205 = vmul.f32 %v2077, %v2077
          %v2206 = vmul.f32 %v2078, %v2078
          %v2207 = vmul.f32 %v2079, %v2079
          %v2208 = vmul.f32 %v2080, %v2080
          %v2209 = vmul.f32 %v2081, %v2081
          %v2210 = vmul.f32 %v2082, %v2082
          %v2211 = vmul.f32 %v2083, %v2083
          %v2212 = vmul.f32 %v2084, %v2084
          %v2213 = vmul.f32 %v2085, %v2085
          %v2214 = vmul.f32 %v2086, %v2086
          %2215 = vadd.xlane.f32.xlu0 %v2183
          %v2216 = vpop.xlane.xlu0 %2215
          %2217 = vadd.xlane.f32.xlu0 %v2184
          %v2218 = vpop.xlane.xlu0 %2217
          %2219 = vadd.xlane.f32.xlu0 %v2185
          %v2220 = vpop.xlane.xlu0 %2219
          %2221 = vadd.xlane.f32.xlu0 %v2186
          %v2222 = vpop.xlane.xlu0 %2221
          %2223 = vadd.xlane.f32.xlu0 %v2187
          %v2224 = vpop.xlane.xlu0 %2223
          %2225 = vadd.xlane.f32.xlu0 %v2188
          %v2226 = vpop.xlane.xlu0 %2225
          %2227 = vadd.xlane.f32.xlu0 %v2189
          %v2228 = vpop.xlane.xlu0 %2227
          %2229 = vadd.xlane.f32.xlu0 %v2190
          %v2230 = vpop.xlane.xlu0 %2229
          %2231 = vadd.xlane.f32.xlu0 %v2191
          %v2232 = vpop.xlane.xlu0 %2231
          %2233 = vadd.xlane.f32.xlu0 %v2192
          %v2234 = vpop.xlane.xlu0 %2233
          %2235 = vadd.xlane.f32.xlu0 %v2193
          %v2236 = vpop.xlane.xlu0 %2235
          %2237 = vadd.xlane.f32.xlu0 %v2194
          %v2238 = vpop.xlane.xlu0 %2237
          %2239 = vadd.xlane.f32.xlu0 %v2195
          %v2240 = vpop.xlane.xlu0 %2239
          %2241 = vadd.xlane.f32.xlu0 %v2196
          %v2242 = vpop.xlane.xlu0 %2241
          %2243 = vadd.xlane.f32.xlu0 %v2197
          %v2244 = vpop.xlane.xlu0 %2243
          %2245 = vadd.xlane.f32.xlu0 %v2198
          %v2246 = vpop.xlane.xlu0 %2245
          %2247 = vadd.xlane.f32.xlu0 %v2199
          %v2248 = vpop.xlane.xlu0 %2247
          %2249 = vadd.xlane.f32.xlu0 %v2200
          %v2250 = vpop.xlane.xlu0 %2249
          %2251 = vadd.xlane.f32.xlu0 %v2201
          %v2252 = vpop.xlane.xlu0 %2251
          %2253 = vadd.xlane.f32.xlu0 %v2202
          %v2254 = vpop.xlane.xlu0 %2253
          %2255 = vadd.xlane.f32.xlu0 %v2203
          %v2256 = vpop.xlane.xlu0 %2255
          %2257 = vadd.xlane.f32.xlu0 %v2204
          %v2258 = vpop.xlane.xlu0 %2257
          %2259 = vadd.xlane.f32.xlu0 %v2205
          %v2260 = vpop.xlane.xlu0 %2259
          %2261 = vadd.xlane.f32.xlu0 %v2206
          %v2262 = vpop.xlane.xlu0 %2261
          %2263 = vadd.xlane.f32.xlu0 %v2207
          %v2264 = vpop.xlane.xlu0 %2263
          %2265 = vadd.xlane.f32.xlu0 %v2208
          %v2266 = vpop.xlane.xlu0 %2265
          %2267 = vadd.xlane.f32.xlu0 %v2209
          %v2268 = vpop.xlane.xlu0 %2267
          %2269 = vadd.xlane.f32.xlu0 %v2210
          %v2270 = vpop.xlane.xlu0 %2269
          %2271 = vadd.xlane.f32.xlu0 %v2211
          %v2272 = vpop.xlane.xlu0 %2271
          %2273 = vadd.xlane.f32.xlu0 %v2212
          %v2274 = vpop.xlane.xlu0 %2273
          %2275 = vadd.xlane.f32.xlu0 %v2213
          %v2276 = vpop.xlane.xlu0 %2275
          %2277 = vadd.xlane.f32.xlu0 %v2214
          %v2278 = vpop.xlane.xlu0 %2277
          %v2279 = vmul.f32 %v2216, 0.0078125
          %v2280 = vmul.f32 %v2218, 0.0078125
          %v2281 = vmul.f32 %v2220, 0.0078125
          %v2282 = vmul.f32 %v2222, 0.0078125
          %v2283 = vmul.f32 %v2224, 0.0078125
          %v2284 = vmul.f32 %v2226, 0.0078125
          %v2285 = vmul.f32 %v2228, 0.0078125
          %v2286 = vmul.f32 %v2230, 0.0078125
          %v2287 = vmul.f32 %v2232, 0.0078125
          %v2288 = vmul.f32 %v2234, 0.0078125
          %v2289 = vmul.f32 %v2236, 0.0078125
          %v2290 = vmul.f32 %v2238, 0.0078125
          %v2291 = vmul.f32 %v2240, 0.0078125
          %v2292 = vmul.f32 %v2242, 0.0078125
          %v2293 = vmul.f32 %v2244, 0.0078125
          %v2294 = vmul.f32 %v2246, 0.0078125
          %v2295 = vmul.f32 %v2248, 0.0078125
          %v2296 = vmul.f32 %v2250, 0.0078125
          %v2297 = vmul.f32 %v2252, 0.0078125
          %v2298 = vmul.f32 %v2254, 0.0078125
          %v2299 = vmul.f32 %v2256, 0.0078125
          %v2300 = vmul.f32 %v2258, 0.0078125
          %v2301 = vmul.f32 %v2260, 0.0078125
          %v2302 = vmul.f32 %v2262, 0.0078125
          %v2303 = vmul.f32 %v2264, 0.0078125
          %v2304 = vmul.f32 %v2266, 0.0078125
          %v2305 = vmul.f32 %v2268, 0.0078125
          %v2306 = vmul.f32 %v2270, 0.0078125
          %v2307 = vmul.f32 %v2272, 0.0078125
          %v2308 = vmul.f32 %v2274, 0.0078125
          %v2309 = vmul.f32 %v2276, 0.0078125
          %v2310 = vmul.f32 %v2278, 0.0078125
          %v2311 = vmul.f32 %v2151, %v2151
          %v2312 = vmul.f32 %v2152, %v2152
          %v2313 = vmul.f32 %v2153, %v2153
          %v2314 = vmul.f32 %v2154, %v2154
          %v2315 = vmul.f32 %v2155, %v2155
          %v2316 = vmul.f32 %v2156, %v2156
          %v2317 = vmul.f32 %v2157, %v2157
          %v2318 = vmul.f32 %v2158, %v2158
          %v2319 = vmul.f32 %v2159, %v2159
          %v2320 = vmul.f32 %v2160, %v2160
          %v2321 = vmul.f32 %v2161, %v2161
          %v2322 = vmul.f32 %v2162, %v2162
          %v2323 = vmul.f32 %v2163, %v2163
          %v2324 = vmul.f32 %v2164, %v2164
          %v2325 = vmul.f32 %v2165, %v2165
          %v2326 = vmul.f32 %v2166, %v2166
          %v2327 = vmul.f32 %v2167, %v2167
          %v2328 = vmul.f32 %v2168, %v2168
          %v2329 = vmul.f32 %v2169, %v2169
          %v2330 = vmul.f32 %v2170, %v2170
          %v2331 = vmul.f32 %v2171, %v2171
          %v2332 = vmul.f32 %v2172, %v2172
          %v2333 = vmul.f32 %v2173, %v2173
          %v2334 = vmul.f32 %v2174, %v2174
          %v2335 = vmul.f32 %v2175, %v2175
          %v2336 = vmul.f32 %v2176, %v2176
          %v2337 = vmul.f32 %v2177, %v2177
          %v2338 = vmul.f32 %v2178, %v2178
          %v2339 = vmul.f32 %v2179, %v2179
          %v2340 = vmul.f32 %v2180, %v2180
          %v2341 = vmul.f32 %v2181, %v2181
          %v2342 = vmul.f32 %v2182, %v2182
          %v2343 = vsub.f32 %v2279, %v2311
          %v2344 = vsub.f32 %v2280, %v2312
          %v2345 = vsub.f32 %v2281, %v2313
          %v2346 = vsub.f32 %v2282, %v2314
          %v2347 = vsub.f32 %v2283, %v2315
          %v2348 = vsub.f32 %v2284, %v2316
          %v2349 = vsub.f32 %v2285, %v2317
          %v2350 = vsub.f32 %v2286, %v2318
          %v2351 = vsub.f32 %v2287, %v2319
          %v2352 = vsub.f32 %v2288, %v2320
          %v2353 = vsub.f32 %v2289, %v2321
          %v2354 = vsub.f32 %v2290, %v2322
          %v2355 = vsub.f32 %v2291, %v2323
          %v2356 = vsub.f32 %v2292, %v2324
          %v2357 = vsub.f32 %v2293, %v2325
          %v2358 = vsub.f32 %v2294, %v2326
          %v2359 = vsub.f32 %v2295, %v2327
          %v2360 = vsub.f32 %v2296, %v2328
          %v2361 = vsub.f32 %v2297, %v2329
          %v2362 = vsub.f32 %v2298, %v2330
          %v2363 = vsub.f32 %v2299, %v2331
          %v2364 = vsub.f32 %v2300, %v2332
          %v2365 = vsub.f32 %v2301, %v2333
          %v2366 = vsub.f32 %v2302, %v2334
          %v2367 = vsub.f32 %v2303, %v2335
          %v2368 = vsub.f32 %v2304, %v2336
          %v2369 = vsub.f32 %v2305, %v2337
          %v2370 = vsub.f32 %v2306, %v2338
          %v2371 = vsub.f32 %v2307, %v2339
          %v2372 = vsub.f32 %v2308, %v2340
          %v2373 = vsub.f32 %v2309, %v2341
          %v2374 = vsub.f32 %v2310, %v2342
          %v2375 = vadd.f32 %v2343, 1e-06
          %v2376 = vadd.f32 %v2344, 1e-06
          %v2377 = vadd.f32 %v2345, 1e-06
          %v2378 = vadd.f32 %v2346, 1e-06
          %v2379 = vadd.f32 %v2347, 1e-06
          %v2380 = vadd.f32 %v2348, 1e-06
          %v2381 = vadd.f32 %v2349, 1e-06
          %v2382 = vadd.f32 %v2350, 1e-06
          %v2383 = vadd.f32 %v2351, 1e-06
          %v2384 = vadd.f32 %v2352, 1e-06
          %v2385 = vadd.f32 %v2353, 1e-06
          %v2386 = vadd.f32 %v2354, 1e-06
          %v2387 = vadd.f32 %v2355, 1e-06
          %v2388 = vadd.f32 %v2356, 1e-06
          %v2389 = vadd.f32 %v2357, 1e-06
          %v2390 = vadd.f32 %v2358, 1e-06
          %v2391 = vadd.f32 %v2359, 1e-06
          %v2392 = vadd.f32 %v2360, 1e-06
          %v2393 = vadd.f32 %v2361, 1e-06
          %v2394 = vadd.f32 %v2362, 1e-06
          %v2395 = vadd.f32 %v2363, 1e-06
          %v2396 = vadd.f32 %v2364, 1e-06
          %v2397 = vadd.f32 %v2365, 1e-06
          %v2398 = vadd.f32 %v2366, 1e-06
          %v2399 = vadd.f32 %v2367, 1e-06
          %v2400 = vadd.f32 %v2368, 1e-06
          %v2401 = vadd.f32 %v2369, 1e-06
          %v2402 = vadd.f32 %v2370, 1e-06
          %v2403 = vadd.f32 %v2371, 1e-06
          %v2404 = vadd.f32 %v2372, 1e-06
          %v2405 = vadd.f32 %v2373, 1e-06
          %v2406 = vadd.f32 %v2374, 1e-06
          %v2407 = vrsqrt.pop %v2375
          %v2408 = vrsqrt.pop %v2376
          %v2409 = vrsqrt.pop %v2377
          %v2410 = vrsqrt.pop %v2378
          %v2411 = vrsqrt.pop %v2379
          %v2412 = vrsqrt.pop %v2380
          %v2413 = vrsqrt.pop %v2381
          %v2414 = vrsqrt.pop %v2382
          %v2415 = vrsqrt.pop %v2383
          %v2416 = vrsqrt.pop %v2384
          %v2417 = vrsqrt.pop %v2385
          %v2418 = vrsqrt.pop %v2386
          %v2419 = vrsqrt.pop %v2387
          %v2420 = vrsqrt.pop %v2388
          %v2421 = vrsqrt.pop %v2389
          %v2422 = vrsqrt.pop %v2390
          %v2423 = vrsqrt.pop %v2391
          %v2424 = vrsqrt.pop %v2392
          %v2425 = vrsqrt.pop %v2393
          %v2426 = vrsqrt.pop %v2394
          %v2427 = vrsqrt.pop %v2395
          %v2428 = vrsqrt.pop %v2396
          %v2429 = vrsqrt.pop %v2397
          %v2430 = vrsqrt.pop %v2398
          %v2431 = vrsqrt.pop %v2399
          %v2432 = vrsqrt.pop %v2400
          %v2433 = vrsqrt.pop %v2401
          %v2434 = vrsqrt.pop %v2402
          %v2435 = vrsqrt.pop %v2403
          %v2436 = vrsqrt.pop %v2404
          %v2437 = vrsqrt.pop %v2405
          %v2438 = vrsqrt.pop %v2406
          %v2439 = vsub.f32 %v2055, %v2151
          %v2440 = vsub.f32 %v2056, %v2152
          %v2441 = vsub.f32 %v2057, %v2153
          %v2442 = vsub.f32 %v2058, %v2154
          %v2443 = vsub.f32 %v2059, %v2155
          %v2444 = vsub.f32 %v2060, %v2156
          %v2445 = vsub.f32 %v2061, %v2157
          %v2446 = vsub.f32 %v2062, %v2158
          %v2447 = vsub.f32 %v2063, %v2159
          %v2448 = vsub.f32 %v2064, %v2160
          %v2449 = vsub.f32 %v2065, %v2161
          %v2450 = vsub.f32 %v2066, %v2162
          %v2451 = vsub.f32 %v2067, %v2163
          %v2452 = vsub.f32 %v2068, %v2164
          %v2453 = vsub.f32 %v2069, %v2165
          %v2454 = vsub.f32 %v2070, %v2166
          %v2455 = vsub.f32 %v2071, %v2167
          %v2456 = vsub.f32 %v2072, %v2168
          %v2457 = vsub.f32 %v2073, %v2169
          %v2458 = vsub.f32 %v2074, %v2170
          %v2459 = vsub.f32 %v2075, %v2171
          %v2460 = vsub.f32 %v2076, %v2172
          %v2461 = vsub.f32 %v2077, %v2173
          %v2462 = vsub.f32 %v2078, %v2174
          %v2463 = vsub.f32 %v2079, %v2175
          %v2464 = vsub.f32 %v2080, %v2176
          %v2465 = vsub.f32 %v2081, %v2177
          %v2466 = vsub.f32 %v2082, %v2178
          %v2467 = vsub.f32 %v2083, %v2179
          %v2468 = vsub.f32 %v2084, %v2180
          %v2469 = vsub.f32 %v2085, %v2181
          %v2470 = vsub.f32 %v2086, %v2182
          %v2471 = vmul.f32 %v2439, %v2407
          %v2472 = vmul.f32 %v2440, %v2408
          %v2473 = vmul.f32 %v2441, %v2409
          %v2474 = vmul.f32 %v2442, %v2410
          %v2475 = vmul.f32 %v2443, %v2411
          %v2476 = vmul.f32 %v2444, %v2412
          %v2477 = vmul.f32 %v2445, %v2413
          %v2478 = vmul.f32 %v2446, %v2414
          %v2479 = vmul.f32 %v2447, %v2415
          %v2480 = vmul.f32 %v2448, %v2416
          %v2481 = vmul.f32 %v2449, %v2417
          %v2482 = vmul.f32 %v2450, %v2418
          %v2483 = vmul.f32 %v2451, %v2419
          %v2484 = vmul.f32 %v2452, %v2420
          %v2485 = vmul.f32 %v2453, %v2421
          %v2486 = vmul.f32 %v2454, %v2422
          %v2487 = vmul.f32 %v2455, %v2423
          %v2488 = vmul.f32 %v2456, %v2424
          %v2489 = vmul.f32 %v2457, %v2425
          %v2490 = vmul.f32 %v2458, %v2426
          %v2491 = vmul.f32 %v2459, %v2427
          %v2492 = vmul.f32 %v2460, %v2428
          %v2493 = vmul.f32 %v2461, %v2429
          %v2494 = vmul.f32 %v2462, %v2430
          %v2495 = vmul.f32 %v2463, %v2431
          %v2496 = vmul.f32 %v2464, %v2432
          %v2497 = vmul.f32 %v2465, %v2433
          %v2498 = vmul.f32 %v2466, %v2434
          %v2499 = vmul.f32 %v2467, %v2435
          %v2500 = vmul.f32 %v2468, %v2436
          %v2501 = vmul.f32 %v2469, %v2437
          %v2502 = vmul.f32 %v2470, %v2438
          %v2503 = vld [vmem:[%s5] sm:$0x1]
          %v2505 = vlaneseq
          %v2506 = vshrl.u32 %v2505, 7
          %v2507 = vsub.s32 0, %v2506
          %v2508 = vrot.slane %v2503, %v2507
          %v2510 = vmul.f32 %v2471, %v2508
          %v2511 = vmul.f32 %v2472, %v2508
          %v2512 = vmul.f32 %v2473, %v2508
          %v2513 = vmul.f32 %v2474, %v2508
          %v2514 = vmul.f32 %v2475, %v2508
          %v2515 = vmul.f32 %v2476, %v2508
          %v2516 = vmul.f32 %v2477, %v2508
          %v2517 = vmul.f32 %v2478, %v2508
          %v2518 = vmul.f32 %v2479, %v2508
          %v2519 = vmul.f32 %v2480, %v2508
          %v2520 = vmul.f32 %v2481, %v2508
          %v2521 = vmul.f32 %v2482, %v2508
          %v2522 = vmul.f32 %v2483, %v2508
          %v2523 = vmul.f32 %v2484, %v2508
          %v2524 = vmul.f32 %v2485, %v2508
          %v2525 = vmul.f32 %v2486, %v2508
          %v2526 = vmul.f32 %v2487, %v2508
          %v2527 = vmul.f32 %v2488, %v2508
          %v2528 = vmul.f32 %v2489, %v2508
          %v2529 = vmul.f32 %v2490, %v2508
          %v2530 = vmul.f32 %v2491, %v2508
          %v2531 = vmul.f32 %v2492, %v2508
          %v2532 = vmul.f32 %v2493, %v2508
          %v2533 = vmul.f32 %v2494, %v2508
          %v2534 = vmul.f32 %v2495, %v2508
          %v2535 = vmul.f32 %v2496, %v2508
          %v2536 = vmul.f32 %v2497, %v2508
          %v2537 = vmul.f32 %v2498, %v2508
          %v2538 = vmul.f32 %v2499, %v2508
          %v2539 = vmul.f32 %v2500, %v2508
          %v2540 = vmul.f32 %v2501, %v2508
          %v2541 = vmul.f32 %v2502, %v2508
          %v2542 = vld [vmem:[%s6] sm:$0x1]
          %v2544 = vlaneseq
          %v2545 = vshrl.u32 %v2544, 7
          %v2546 = vsub.s32 0, %v2545
          %v2547 = vrot.slane %v2542, %v2546
          %v2549 = vadd.f32 %v2510, %v2547
          %v2550 = vadd.f32 %v2511, %v2547
          %v2551 = vadd.f32 %v2512, %v2547
          %v2552 = vadd.f32 %v2513, %v2547
          %v2553 = vadd.f32 %v2514, %v2547
          %v2554 = vadd.f32 %v2515, %v2547
          %v2555 = vadd.f32 %v2516, %v2547
          %v2556 = vadd.f32 %v2517, %v2547
          %v2557 = vadd.f32 %v2518, %v2547
          %v2558 = vadd.f32 %v2519, %v2547
          %v2559 = vadd.f32 %v2520, %v2547
          %v2560 = vadd.f32 %v2521, %v2547
          %v2561 = vadd.f32 %v2522, %v2547
          %v2562 = vadd.f32 %v2523, %v2547
          %v2563 = vadd.f32 %v2524, %v2547
          %v2564 = vadd.f32 %v2525, %v2547
          %v2565 = vadd.f32 %v2526, %v2547
          %v2566 = vadd.f32 %v2527, %v2547
          %v2567 = vadd.f32 %v2528, %v2547
          %v2568 = vadd.f32 %v2529, %v2547
          %v2569 = vadd.f32 %v2530, %v2547
          %v2570 = vadd.f32 %v2531, %v2547
          %v2571 = vadd.f32 %v2532, %v2547
          %v2572 = vadd.f32 %v2533, %v2547
          %v2573 = vadd.f32 %v2534, %v2547
          %v2574 = vadd.f32 %v2535, %v2547
          %v2575 = vadd.f32 %v2536, %v2547
          %v2576 = vadd.f32 %v2537, %v2547
          %v2577 = vadd.f32 %v2538, %v2547
          %v2578 = vadd.f32 %v2539, %v2547
          %v2579 = vadd.f32 %v2540, %v2547
          %v2580 = vadd.f32 %v2541, %v2547
          %2581 = vst [vmem:[%s423] sm:$0xff] %v2549
          %2582 = vst [vmem:[%s423 + $0x8] sm:$0xff] %v2550
          %2583 = vst [vmem:[%s423 + $0x10] sm:$0xff] %v2551
          %2584 = vst [vmem:[%s423 + $0x18] sm:$0xff] %v2552
          %2585 = vst [vmem:[%s423 + $0x20] sm:$0xff] %v2553
          %2586 = vst [vmem:[%s423 + $0x28] sm:$0xff] %v2554
          %2587 = vst [vmem:[%s423 + $0x30] sm:$0xff] %v2555
          %2588 = vst [vmem:[%s423 + $0x38] sm:$0xff] %v2556
          %2589 = vst [vmem:[%s423 + $0x40] sm:$0xff] %v2557
          %2590 = vst [vmem:[%s423 + $0x48] sm:$0xff] %v2558
          %2591 = vst [vmem:[%s423 + $0x50] sm:$0xff] %v2559
          %2592 = vst [vmem:[%s423 + $0x58] sm:$0xff] %v2560
          %2593 = vst [vmem:[%s423 + $0x60] sm:$0xff] %v2561
          %2594 = vst [vmem:[%s423 + $0x68] sm:$0xff] %v2562
          %2595 = vst [vmem:[%s423 + $0x70] sm:$0xff] %v2563
          %2596 = vst [vmem:[%s423 + $0x78] sm:$0xff] %v2564
          %2597 = vst [vmem:[%s423 + $0x80] sm:$0xff] %v2565
          %2598 = vst [vmem:[%s423 + $0x88] sm:$0xff] %v2566
          %2599 = vst [vmem:[%s423 + $0x90] sm:$0xff] %v2567
          %2600 = vst [vmem:[%s423 + $0x98] sm:$0xff] %v2568
          %2601 = vst [vmem:[%s423 + $0xa0] sm:$0xff] %v2569
          %2602 = vst [vmem:[%s423 + $0xa8] sm:$0xff] %v2570
          %2603 = vst [vmem:[%s423 + $0xb0] sm:$0xff] %v2571
          %2604 = vst [vmem:[%s423 + $0xb8] sm:$0xff] %v2572
          %2605 = vst [vmem:[%s423 + $0xc0] sm:$0xff] %v2573
          %2606 = vst [vmem:[%s423 + $0xc8] sm:$0xff] %v2574
          %2607 = vst [vmem:[%s423 + $0xd0] sm:$0xff] %v2575
          %2608 = vst [vmem:[%s423 + $0xd8] sm:$0xff] %v2576
          %2609 = vst [vmem:[%s423 + $0xe0] sm:$0xff] %v2577
          %2610 = vst [vmem:[%s423 + $0xe8] sm:$0xff] %v2578
          %2611 = vst [vmem:[%s423 + $0xf0] sm:$0xff] %v2579
          %2612 = vst [vmem:[%s423 + $0xf8] sm:$0xff] %v2580
        $region72: #{tpu_custom_call.1} parent=47 // pred_fallthru
          _
        %s2613 = sand.u32 %s217, 1
        %s2614 = scalar_lea.sflag [#allocation5], %s2613
        %s2615 = sand.u32 %s217, 1
        %s2616 = smul.addr %s2615, 256
        %s2617 = scalar_lea.vmem [#allocation11], %s2616
        // Predicated region
        $region73: #{tpu_custom_call.1} parent=47 // pred_check
          %p2618 = pneg %p227
        $region74: #{tpu_custom_call.1} parent=47 // pred_check_branch
          %2620 = sbr.rel (%p2618) target = $region76
        $region75: #{tpu_custom_call.1} parent=47 // pred_region
          %s2621 = smul.u32 32, %s34
          %s2623 = ssub.s32 4096, 4096
          %2624 = vsyncadd %s2614, %s2623
          %s2625 = smul.addr %s2621, 128
          %s2626 = scalar_lea.hbm %s7, %s2625
          %s2627 = sshll.u32 %s2617, 4
          %s2628 = int_to_ptr.vmem [resolvable:$true] %s2627
          %2633 = dma.vmem_to_hbm [thread:$0]  %s2628, 4096, %s2626, %s2614, 128, 128, 8
        $region76: #{tpu_custom_call.1} parent=47 // pred_fallthru
          _
      $region48: #{tpu_custom_call.1} parent=5 // pred_fallthru
        _
      %p2634 = scmp.le.s32.totalorder 2, %s25
      // Predicated region
      $region77: #{tpu_custom_call.1} parent=5 // pred_check
        %p2635 = pneg %p2634
      $region78: #{tpu_custom_call.1} parent=5 // pred_check_branch
        %2637 = sbr.rel (%p2635) target = $region80
      $region79: #{tpu_custom_call.1} parent=5 // pred_region
        %s2638 = ssub.s32 %s25, 2
        // Predicated region
        $region81: #{tpu_custom_call.1} parent=79 // pred_check
          %p2639 = pneg %p233
        $region82: #{tpu_custom_call.1} parent=79 // pred_check_branch
          %2641 = sbr.rel (%p2639) target = $region84
        $region83: #{tpu_custom_call.1} parent=79 // pred_region
          %s2642 = sand.u32 %s218, 1
          %s2643 = scalar_lea.sflag [#allocation5], %s2642
          %s2644 = sand.u32 %s218, 1
          %s2645 = smul.addr %s2644, 256
          %s2646 = scalar_lea.vmem [#allocation11], %s2645
          %2647 = dma.done %s2643, 4096
        $region84: #{tpu_custom_call.1} parent=79 // pred_fallthru
          _
      $region80: #{tpu_custom_call.1} parent=5 // pred_fallthru
        _
    $region6: #{tpu_custom_call.1} parent=1 // loop_footer
      %s29 = sadd.s32 1, %s25
    $region7: #{tpu_custom_call.1} parent=1 // loop_footer_branch
      %24 = sbr.rel target = $region3
    $region8: #{tpu_custom_call.1} parent=1 // loop_exit
      _
    %2648 = vsyncpa [#allocation4], 1
    %s2649 = scalar_lea.sflag [#allocation4], 1
    %2650 = vsyncpa %s2649, 1
    %2651 = vsyncpa [#allocation7], 1
    %s2652 = scalar_lea.sflag [#allocation7], 1
    %2653 = vsyncpa %s2652, 1
    %2654 = vsyncpa [#allocation10], 1
    %s2655 = scalar_lea.sflag [#allocation10], 1
    %2656 = vsyncpa %s2655, 1
    %2657 = vsyncpa [#allocation5], 1
    %s2658 = scalar_lea.sflag [#allocation5], 1
    %2659 = vsyncpa %s2658, 1

</llo_original>
